<compile_context>
chip_gen: v7x
topology: tpu7x:2x2x1
jax: 0.10.0
libtpu: 0.0.40
codegen_flags: <defaults>
</compile_context>

<pallas_src>
import numpy as np
import jax
import jax.numpy as jnp
from jax.experimental import pallas as pl
from jax.experimental.pallas import tpu as pltpu


# ----------------------------- fused ResBlock kernel -----------------------------

def _make_resblock_kernel(H, W, Cin, Cout, pooling):
    WCin = W * Cin
    WCout = W * Cout
    f32 = jnp.float32

    def kernel(x_ref, b1_ref, b2_ref, bd_ref, sh_ref, o_ref):
        # x_ref : (1, H, W*Cin)      lane-fused input slab (one image)
        # b1_ref: (3, W*Cin, W*Cout) banded conv1 weights (BN1 scale folded in)
        # b2_ref: (3, W*Cout, W*Cout) banded conv2 weights (BN2 scale folded in)
        # bd_ref: (3, W*Cin, W*Cout) banded downsample weights (BNd scale folded in)
        # sh_ref: (2, W*Cout)        row0 = conv1 shift (lane-tiled), row1 = conv2+downsample shift
        # o_ref : (1, H, W*Cout)     lane-dense output slab
        row_i = jax.lax.broadcasted_iota(jnp.int32, (H, WCin), 0)
        row_o = jax.lax.broadcasted_iota(jnp.int32, (H, WCout), 0)

        def shift_rows(a, up, idx, fill):
            # up=True : result[h] = a[h-1]  (fill at h == 0)
            # up=False: result[h] = a[h+1]  (fill at h == H-1)
            if up:
                r = pltpu.roll(a, shift=1, axis=0)
                return jnp.where(idx == 0, fill, r)
            r = pltpu.roll(a, shift=H - 1, axis=0)
            return jnp.where(idx == H - 1, fill, r)

        x = x_ref[0]  # (H, W*Cin)
        x_bands = (shift_rows(x, True, row_i, 0.0), x, shift_rows(x, False, row_i, 0.0))

        # conv1 (+BN1 scale) and downsample conv (+BNd scale) share the input bands.
        acc1 = jnp.zeros((H, WCout), f32)
        accd = jnp.zeros((H, WCout), f32)
        for kh in range(3):
            acc1 = acc1 + jnp.dot(x_bands[kh], b1_ref[kh], preferred_element_type=f32)
            accd = accd + jnp.dot(x_bands[kh], bd_ref[kh], preferred_element_type=f32)
        a1 = jnp.maximum(acc1 + sh_ref[0:1, :], 0.0)          # BN1 shift + ReLU

        # conv2 (+BN2 scale) on the conv1 output bands.
        a_bands = (shift_rows(a1, True, row_o, 0.0), a1, shift_rows(a1, False, row_o, 0.0))
        acc2 = jnp.zeros((H, WCout), f32)
        for kh in range(3):
            acc2 = acc2 + jnp.dot(a_bands[kh], b2_ref[kh], preferred_element_type=f32)

        # BN2 shift + downsample BN shift (pre-summed) + residual add.
        s = acc2 + accd + sh_ref[1:2, :]

        if pooling:
            # 3x3 max pool, stride 1, padding 1 (pad value -inf, matches PyTorch MaxPool2d).
            ninf = f32(-jnp.inf)
            col_o = jax.lax.broadcasted_iota(jnp.int32, (H, WCout), 1)
            # W direction: lane rolls by +-Cout with edge masks.
            left = jnp.where(col_o < Cout, ninf, pltpu.roll(s, shift=Cout, axis=1))
            right = jnp.where(col_o >= WCout - Cout, ninf,
                              pltpu.roll(s, shift=WCout - Cout, axis=1))
            mw = jnp.maximum(s, jnp.maximum(left, right))
            # H direction: sublane rolls by +-1 with edge masks.
            up = shift_rows(mw, True, row_o, ninf)
            dn = shift_rows(mw, False, row_o, ninf)
            s = jnp.maximum(mw, jnp.maximum(up, dn))

        o_ref[0] = s

    return kernel


def resblock_forward(x2d, B1, B2, Bd, sh, *, H, W, Cin, Cout, pooling):
    """Fused ResBlock forward on lane-fused slabs. x2d: (N, H, W*Cin) -> (N, H, W*Cout)."""
    N = x2d.shape[0]
    WCin, WCout = W * Cin, W * Cout
    kernel = _make_resblock_kernel(H, W, Cin, Cout, pooling)
    return pl.pallas_call(
        kernel,
        out_shape=jax.ShapeDtypeStruct((N, H, WCout), jnp.float32),
        grid=(N,),
        in_specs=[
            pl.BlockSpec((1, H, WCin), lambda n: (n, 0, 0)),
            pl.BlockSpec((3, WCin, WCout), lambda n: (0, 0, 0)),
            pl.BlockSpec((3, WCout, WCout), lambda n: (0, 0, 0)),
            pl.BlockSpec((3, WCin, WCout), lambda n: (0, 0, 0)),
            pl.BlockSpec((2, WCout), lambda n: (0, 0)),
        ],
        out_specs=pl.BlockSpec((1, H, WCout), lambda n: (n, 0, 0)),
        compiler_params=pltpu.CompilerParams(dimension_semantics=("parallel",)),
    )(x2d, B1, B2, Bd, sh)


# ----------------------------- parameter prep -----------------------------

def _fold_bn(bias, gamma, beta, mean, var, eps=1e-5):
    scale = gamma / jnp.sqrt(var + eps)
    shift = (bias - mean) * scale + beta
    return scale.astype(jnp.float32), shift.astype(jnp.float32)


def _banded_conv_weight(w_hwio, W):
    """(3, 3, Cin, Cout) HWIO -> (3, W*Cin, W*Cout) block-banded per-row matmul weights.

    B[kh, wi*Cin+ci, wo*Cout+co] = w[kh, wi-wo+1, ci, co] if |wi-wo| <= 1 else 0,
    i.e. the W-direction taps and W-boundary zero padding are baked into the matrix.
    """
    w = np.asarray(w_hwio, dtype=np.float32)
    Cin, Cout = w.shape[2], w.shape[3]
    B = np.zeros((3, W * Cin, W * Cout), np.float32)
    for kh in range(3):
        for wo in range(W):
            for kw in range(3):
                wi = wo + kw - 1
                if 0 <= wi < W:
                    B[kh, wi * Cin:(wi + 1) * Cin, wo * Cout:(wo + 1) * Cout] = w[kh, kw]
    return jnp.asarray(B)


# ----------------------------- module wrapper -----------------------------

class ResBlockPallas:
    """Pallas port of the PyTorch ResBlock (inference semantics)."""

    def __init__(self, in_channels, out_channels, stride=1, downsample=False,
                 pooling=False, *, key):
        assert stride == 1, "this Pallas port implements stride=1 only"
        assert downsample, "PyTorch forward requires downsample=True (residual undefined otherwise)"
        self.in_channels = in_channels
        self.out_channels = out_channels
        self.pooling = pooling
        ks = jax.random.split(key, 18)

        def conv_params(kw, kb, cin, cout):
            w = 0.1 * jax.random.normal(kw, (3, 3, cin, cout), jnp.float32)  # HWIO
            b = 0.1 * jax.random.normal(kb, (cout,), jnp.float32)
            return w, b

        def bn_params(k0, k1, k2, k3, c):
            gamma = 1.0 + 0.1 * jax.random.normal(k0, (c,), jnp.float32)
            beta = 0.1 * jax.random.normal(k1, (c,), jnp.float32)
            mean = 0.1 * jax.random.normal(k2, (c,), jnp.float32)
            var = 1.0 + 0.5 * jax.random.uniform(k3, (c,), jnp.float32)
            return gamma, beta, mean, var

        # conv1 + bn1
        self.w1, b1 = conv_params(ks[0], ks[1], in_channels, out_channels)
        self.s1, self.t1 = _fold_bn(b1, *bn_params(ks[2], ks[3], ks[4], ks[5], out_channels))
        # conv2 + bn2
        self.w2, b2 = conv_params(ks[6], ks[7], out_channels, out_channels)
        self.s2, self.t2 = _fold_bn(b2, *bn_params(ks[8], ks[9], ks[10], ks[11], out_channels))
        # downsample conv + bn
        self.wd, bd = conv_params(ks[12], ks[13], in_channels, out_channels)
        self.sd, self.td = _fold_bn(bd, *bn_params(ks[14], ks[15], ks[16], ks[17], out_channels))

        # BN scale folded into the conv weights (kernel epilogue is shift-only).
        self.w1s = self.w1 * self.s1
        self.w2s = self.w2 * self.s2
        self.wds = self.wd * self.sd
        self._prep_cache = {}

    def _prepared(self, W):
        if W not in self._prep_cache:
            B1 = _banded_conv_weight(self.w1s, W)
            B2 = _banded_conv_weight(self.w2s, W)
            Bd = _banded_conv_weight(self.wds, W)
            sh = jnp.stack([jnp.tile(self.t1, W),
                            jnp.tile(self.t2 + self.td, W)], axis=0).astype(jnp.float32)
            self._prep_cache[W] = (B1, B2, Bd, sh)
        return self._prep_cache[W]

    def __call__(self, x_nchw):
        N, Cin, H, W = x_nchw.shape
        assert Cin == self.in_channels
        Cout = self.out_channels
        B1, B2, Bd, sh = self._prepared(W)
        # NCHW -> NHWC -> lane-fused (N, H, W*Cin) slab (reshape is free: same layout).
        x2d = jnp.transpose(x_nchw, (0, 2, 3, 1)).astype(jnp.float32).reshape(N, H, W * Cin)
        out2d = resblock_forward(x2d, B1, B2, Bd, sh,
                                 H=H, W=W, Cin=Cin, Cout=Cout, pooling=self.pooling)
        out = out2d.reshape(N, H, W, Cout)
        # dropout: eval-mode identity (see TODO at top of file)
        return jnp.transpose(out, (0, 3, 1, 2))  # NHWC -> NCHW


# ----------------------------- pure-JAX reference (for self-check) -----------------------------

def _reference(x_nchw, blk):
    x = jnp.transpose(x_nchw, (0, 2, 3, 1)).astype(jnp.float32)

    def conv(inp, w):
        return jax.lax.conv_general_dilated(
            inp, w, (1, 1), ((1, 1), (1, 1)),
            dimension_numbers=('NHWC', 'HWIO', 'NHWC'))

    out = jnp.maximum(conv(x, blk.w1) * blk.s1 + blk.t1, 0.0)
    out = conv(out, blk.w2) * blk.s2 + blk.t2
    res = conv(x, blk.wd) * blk.sd + blk.td
    s = out + res
    if blk.pooling:
        s = jax.lax.reduce_window(s, -jnp.inf, jax.lax.max,
                                  (1, 3, 3, 1), (1, 1, 1, 1),
                                  ((0, 0), (1, 1), (1, 1), (0, 0)))
    return jnp.transpose(s, (0, 3, 1, 2))


if __name__ == "__main__":
    key = jax.random.PRNGKey(0)
    kx, kp = jax.random.split(key)
    x = jax.random.normal(kx, (2, 4, 16, 16), jnp.float32)   # (batch, channel, H, W), PyTorch NCHW

    blk = ResBlockPallas(in_channels=4, out_channels=8, stride=1,
                         downsample=True, pooling=True, key=kp)

    y = jax.block_until_ready(blk(x))
    y_ref = jax.block_until_ready(_reference(x, blk))

    assert y.shape == (2, 8, 16, 16), y.shape
    assert bool(jnp.allclose(y, y_ref, atol=1e-2, rtol=1e-2)), \
        float(jnp.max(jnp.abs(y - y_ref)))
    print("KERNEL_OK")
</pallas_src>

<mosaic_0001>
module attributes {stable_mosaic.version = 11 : i64} {
  func.func @kernel(%arg0: i32, %arg1: memref<1x16x64xf32, #tpu.memory_space<vmem>>, %arg2: memref<3x64x128xf32, #tpu.memory_space<vmem>>, %arg3: memref<3x128x128xf32, #tpu.memory_space<vmem>>, %arg4: memref<3x64x128xf32, #tpu.memory_space<vmem>>, %arg5: memref<2x128xf32, #tpu.memory_space<vmem>>, %arg6: memref<1x16x128xf32, #tpu.memory_space<vmem>>) attributes {dimension_semantics = [#tpu.dimension_semantics<parallel>], iteration_bounds = array<i64: 2>, scalar_prefetch = 0 : i64, scratch_operands = 0 : i64, tpu.core_type = #tpu.core_type<tc>, window_params = [{transform_indices = @transform_0, window_bounds = array<i64: 1, 16, 64>}, {pipeline_mode = #tpu.pipeline_mode<synchronous>, transform_indices = @transform_1, window_bounds = array<i64: 3, 64, 128>}, {pipeline_mode = #tpu.pipeline_mode<synchronous>, transform_indices = @transform_2, window_bounds = array<i64: 3, 128, 128>}, {pipeline_mode = #tpu.pipeline_mode<synchronous>, transform_indices = @transform_3, window_bounds = array<i64: 3, 64, 128>}, {pipeline_mode = #tpu.pipeline_mode<synchronous>, transform_indices = @transform_4, window_bounds = array<i64: 2, 128>}, {transform_indices = @transform_5, window_bounds = array<i64: 1, 16, 128>}]} {
    %0 = tpu.iota {dimensions = array<i32: 0>} : vector<16x64xi32>
    %1 = tpu.iota {dimensions = array<i32: 0>} : vector<16x128xi32>
    %c0 = arith.constant 0 : index
    %c0_0 = arith.constant 0 : index
    %c0_1 = arith.constant 0 : index
    %2 = vector.load %arg1[%c0, %c0_0, %c0_1] : memref<1x16x64xf32, #tpu.memory_space<vmem>>, vector<1x16x64xf32>
    %3 = vector.shape_cast %2 : vector<1x16x64xf32> to vector<16x64xf32>
    %c1_i32 = arith.constant 1 : i32
    %4 = tpu.dynamic_rotate %3 by %c1_i32 dim 0 : vector<16x64xf32>, i32 -> vector<16x64xf32>
    %c0_i32 = arith.constant 0 : i32
    %5 = vector.broadcast %c0_i32 : i32 to vector<16x64xi32>
    %6 = arith.cmpi eq, %0, %5 : vector<16x64xi32>
    %cst = arith.constant 0.000000e+00 : f32
    %7 = vector.broadcast %cst : f32 to vector<16x64xf32>
    %8 = arith.select %6, %7, %4 : vector<16x64xi1>, vector<16x64xf32>
    %c15_i32 = arith.constant 15 : i32
    %9 = tpu.dynamic_rotate %3 by %c15_i32 dim 0 : vector<16x64xf32>, i32 -> vector<16x64xf32>
    %c15_i32_2 = arith.constant 15 : i32
    %10 = vector.broadcast %c15_i32_2 : i32 to vector<16x64xi32>
    %11 = arith.cmpi eq, %0, %10 : vector<16x64xi32>
    %cst_3 = arith.constant 0.000000e+00 : f32
    %12 = vector.broadcast %cst_3 : f32 to vector<16x64xf32>
    %13 = arith.select %11, %12, %9 : vector<16x64xi1>, vector<16x64xf32>
    %cst_4 = arith.constant 0.000000e+00 : f32
    %14 = vector.broadcast %cst_4 : f32 to vector<16x128xf32>
    %cst_5 = arith.constant 0.000000e+00 : f32
    %15 = vector.broadcast %cst_5 : f32 to vector<16x128xf32>
    %c0_6 = arith.constant 0 : index
    %c0_7 = arith.constant 0 : index
    %c0_8 = arith.constant 0 : index
    %16 = vector.load %arg2[%c0_6, %c0_7, %c0_8] : memref<3x64x128xf32, #tpu.memory_space<vmem>>, vector<1x64x128xf32>
    %17 = vector.shape_cast %16 : vector<1x64x128xf32> to vector<64x128xf32>
    %cst_9 = arith.constant dense<0.000000e+00> : vector<16x128xf32>
    %18 = tpu.matmul %8, %17, %cst_9 {dimension_numbers = #tpu.dot_dimension_numbers<[1], [0], [0], [1], [0, 0, 1, 1], [], []>} : vector<16x64xf32>, vector<64x128xf32>, vector<16x128xf32> -> vector<16x128xf32>
    %19 = arith.addf %14, %18 : vector<16x128xf32>
    %c0_10 = arith.constant 0 : index
    %c0_11 = arith.constant 0 : index
    %c0_12 = arith.constant 0 : index
    %20 = vector.load %arg4[%c0_10, %c0_11, %c0_12] : memref<3x64x128xf32, #tpu.memory_space<vmem>>, vector<1x64x128xf32>
    %21 = vector.shape_cast %20 : vector<1x64x128xf32> to vector<64x128xf32>
    %cst_13 = arith.constant dense<0.000000e+00> : vector<16x128xf32>
    %22 = tpu.matmul %8, %21, %cst_13 {dimension_numbers = #tpu.dot_dimension_numbers<[1], [0], [0], [1], [0, 0, 1, 1], [], []>} : vector<16x64xf32>, vector<64x128xf32>, vector<16x128xf32> -> vector<16x128xf32>
    %23 = arith.addf %15, %22 : vector<16x128xf32>
    %c1 = arith.constant 1 : index
    %c0_14 = arith.constant 0 : index
    %c0_15 = arith.constant 0 : index
    %24 = vector.load %arg2[%c1, %c0_14, %c0_15] : memref<3x64x128xf32, #tpu.memory_space<vmem>>, vector<1x64x128xf32>
    %25 = vector.shape_cast %24 : vector<1x64x128xf32> to vector<64x128xf32>
    %cst_16 = arith.constant dense<0.000000e+00> : vector<16x128xf32>
    %26 = tpu.matmul %3, %25, %cst_16 {dimension_numbers = #tpu.dot_dimension_numbers<[1], [0], [0], [1], [0, 0, 1, 1], [], []>} : vector<16x64xf32>, vector<64x128xf32>, vector<16x128xf32> -> vector<16x128xf32>
    %27 = arith.addf %19, %26 : vector<16x128xf32>
    %c1_17 = arith.constant 1 : index
    %c0_18 = arith.constant 0 : index
    %c0_19 = arith.constant 0 : index
    %28 = vector.load %arg4[%c1_17, %c0_18, %c0_19] : memref<3x64x128xf32, #tpu.memory_space<vmem>>, vector<1x64x128xf32>
    %29 = vector.shape_cast %28 : vector<1x64x128xf32> to vector<64x128xf32>
    %cst_20 = arith.constant dense<0.000000e+00> : vector<16x128xf32>
    %30 = tpu.matmul %3, %29, %cst_20 {dimension_numbers = #tpu.dot_dimension_numbers<[1], [0], [0], [1], [0, 0, 1, 1], [], []>} : vector<16x64xf32>, vector<64x128xf32>, vector<16x128xf32> -> vector<16x128xf32>
    %31 = arith.addf %23, %30 : vector<16x128xf32>
    %c2 = arith.constant 2 : index
    %c0_21 = arith.constant 0 : index
    %c0_22 = arith.constant 0 : index
    %32 = vector.load %arg2[%c2, %c0_21, %c0_22] : memref<3x64x128xf32, #tpu.memory_space<vmem>>, vector<1x64x128xf32>
    %33 = vector.shape_cast %32 : vector<1x64x128xf32> to vector<64x128xf32>
    %cst_23 = arith.constant dense<0.000000e+00> : vector<16x128xf32>
    %34 = tpu.matmul %13, %33, %cst_23 {dimension_numbers = #tpu.dot_dimension_numbers<[1], [0], [0], [1], [0, 0, 1, 1], [], []>} : vector<16x64xf32>, vector<64x128xf32>, vector<16x128xf32> -> vector<16x128xf32>
    %35 = arith.addf %27, %34 : vector<16x128xf32>
    %c2_24 = arith.constant 2 : index
    %c0_25 = arith.constant 0 : index
    %c0_26 = arith.constant 0 : index
    %36 = vector.load %arg4[%c2_24, %c0_25, %c0_26] : memref<3x64x128xf32, #tpu.memory_space<vmem>>, vector<1x64x128xf32>
    %37 = vector.shape_cast %36 : vector<1x64x128xf32> to vector<64x128xf32>
    %cst_27 = arith.constant dense<0.000000e+00> : vector<16x128xf32>
    %38 = tpu.matmul %13, %37, %cst_27 {dimension_numbers = #tpu.dot_dimension_numbers<[1], [0], [0], [1], [0, 0, 1, 1], [], []>} : vector<16x64xf32>, vector<64x128xf32>, vector<16x128xf32> -> vector<16x128xf32>
    %39 = arith.addf %31, %38 : vector<16x128xf32>
    %c0_28 = arith.constant 0 : index
    %c0_29 = arith.constant 0 : index
    %40 = vector.load %arg5[%c0_28, %c0_29] : memref<2x128xf32, #tpu.memory_space<vmem>>, vector<1x128xf32>
    %41 = vector.broadcast %40 : vector<1x128xf32> to vector<16x128xf32>
    %42 = arith.addf %35, %41 : vector<16x128xf32>
    %cst_30 = arith.constant 0.000000e+00 : f32
    %43 = vector.broadcast %cst_30 : f32 to vector<16x128xf32>
    %44 = arith.maximumf %42, %43 : vector<16x128xf32>
    %c1_i32_31 = arith.constant 1 : i32
    %45 = tpu.dynamic_rotate %44 by %c1_i32_31 dim 0 : vector<16x128xf32>, i32 -> vector<16x128xf32>
    %c0_i32_32 = arith.constant 0 : i32
    %46 = vector.broadcast %c0_i32_32 : i32 to vector<16x128xi32>
    %47 = arith.cmpi eq, %1, %46 : vector<16x128xi32>
    %cst_33 = arith.constant 0.000000e+00 : f32
    %48 = vector.broadcast %cst_33 : f32 to vector<16x128xf32>
    %49 = arith.select %47, %48, %45 : vector<16x128xi1>, vector<16x128xf32>
    %c15_i32_34 = arith.constant 15 : i32
    %50 = tpu.dynamic_rotate %44 by %c15_i32_34 dim 0 : vector<16x128xf32>, i32 -> vector<16x128xf32>
    %c15_i32_35 = arith.constant 15 : i32
    %51 = vector.broadcast %c15_i32_35 : i32 to vector<16x128xi32>
    %52 = arith.cmpi eq, %1, %51 : vector<16x128xi32>
    %cst_36 = arith.constant 0.000000e+00 : f32
    %53 = vector.broadcast %cst_36 : f32 to vector<16x128xf32>
    %54 = arith.select %52, %53, %50 : vector<16x128xi1>, vector<16x128xf32>
    %cst_37 = arith.constant 0.000000e+00 : f32
    %55 = vector.broadcast %cst_37 : f32 to vector<16x128xf32>
    %c0_38 = arith.constant 0 : index
    %c0_39 = arith.constant 0 : index
    %c0_40 = arith.constant 0 : index
    %56 = vector.load %arg3[%c0_38, %c0_39, %c0_40] : memref<3x128x128xf32, #tpu.memory_space<vmem>>, vector<1x128x128xf32>
    %57 = vector.shape_cast %56 : vector<1x128x128xf32> to vector<128x128xf32>
    %cst_41 = arith.constant dense<0.000000e+00> : vector<16x128xf32>
    %58 = tpu.matmul %49, %57, %cst_41 {dimension_numbers = #tpu.dot_dimension_numbers<[1], [0], [0], [1], [0, 0, 1, 1], [], []>} : vector<16x128xf32>, vector<128x128xf32>, vector<16x128xf32> -> vector<16x128xf32>
    %59 = arith.addf %55, %58 : vector<16x128xf32>
    %c1_42 = arith.constant 1 : index
    %c0_43 = arith.constant 0 : index
    %c0_44 = arith.constant 0 : index
    %60 = vector.load %arg3[%c1_42, %c0_43, %c0_44] : memref<3x128x128xf32, #tpu.memory_space<vmem>>, vector<1x128x128xf32>
    %61 = vector.shape_cast %60 : vector<1x128x128xf32> to vector<128x128xf32>
    %cst_45 = arith.constant dense<0.000000e+00> : vector<16x128xf32>
    %62 = tpu.matmul %44, %61, %cst_45 {dimension_numbers = #tpu.dot_dimension_numbers<[1], [0], [0], [1], [0, 0, 1, 1], [], []>} : vector<16x128xf32>, vector<128x128xf32>, vector<16x128xf32> -> vector<16x128xf32>
    %63 = arith.addf %59, %62 : vector<16x128xf32>
    %c2_46 = arith.constant 2 : index
    %c0_47 = arith.constant 0 : index
    %c0_48 = arith.constant 0 : index
    %64 = vector.load %arg3[%c2_46, %c0_47, %c0_48] : memref<3x128x128xf32, #tpu.memory_space<vmem>>, vector<1x128x128xf32>
    %65 = vector.shape_cast %64 : vector<1x128x128xf32> to vector<128x128xf32>
    %cst_49 = arith.constant dense<0.000000e+00> : vector<16x128xf32>
    %66 = tpu.matmul %54, %65, %cst_49 {dimension_numbers = #tpu.dot_dimension_numbers<[1], [0], [0], [1], [0, 0, 1, 1], [], []>} : vector<16x128xf32>, vector<128x128xf32>, vector<16x128xf32> -> vector<16x128xf32>
    %67 = arith.addf %63, %66 : vector<16x128xf32>
    %68 = arith.addf %67, %39 : vector<16x128xf32>
    %c1_50 = arith.constant 1 : index
    %c0_51 = arith.constant 0 : index
    %69 = vector.load %arg5[%c1_50, %c0_51] : memref<2x128xf32, #tpu.memory_space<vmem>>, vector<1x128xf32>
    %70 = vector.broadcast %69 : vector<1x128xf32> to vector<16x128xf32>
    %71 = arith.addf %68, %70 : vector<16x128xf32>
    %72 = tpu.iota {dimensions = array<i32: 1>} : vector<16x128xi32>
    %c8_i32 = arith.constant 8 : i32
    %73 = vector.broadcast %c8_i32 : i32 to vector<16x128xi32>
    %74 = arith.cmpi slt, %72, %73 : vector<16x128xi32>
    %c8_i32_52 = arith.constant 8 : i32
    %75 = tpu.dynamic_rotate %71 by %c8_i32_52 dim 1 : vector<16x128xf32>, i32 -> vector<16x128xf32>
    %cst_53 = arith.constant 0xFF800000 : f32
    %76 = vector.broadcast %cst_53 : f32 to vector<16x128xf32>
    %77 = arith.select %74, %76, %75 : vector<16x128xi1>, vector<16x128xf32>
    %c120_i32 = arith.constant 120 : i32
    %78 = vector.broadcast %c120_i32 : i32 to vector<16x128xi32>
    %79 = arith.cmpi sge, %72, %78 : vector<16x128xi32>
    %c120_i32_54 = arith.constant 120 : i32
    %80 = tpu.dynamic_rotate %71 by %c120_i32_54 dim 1 : vector<16x128xf32>, i32 -> vector<16x128xf32>
    %cst_55 = arith.constant 0xFF800000 : f32
    %81 = vector.broadcast %cst_55 : f32 to vector<16x128xf32>
    %82 = arith.select %79, %81, %80 : vector<16x128xi1>, vector<16x128xf32>
    %83 = arith.maximumf %77, %82 : vector<16x128xf32>
    %84 = arith.maximumf %71, %83 : vector<16x128xf32>
    %c1_i32_56 = arith.constant 1 : i32
    %85 = tpu.dynamic_rotate %84 by %c1_i32_56 dim 0 : vector<16x128xf32>, i32 -> vector<16x128xf32>
    %c0_i32_57 = arith.constant 0 : i32
    %86 = vector.broadcast %c0_i32_57 : i32 to vector<16x128xi32>
    %87 = arith.cmpi eq, %1, %86 : vector<16x128xi32>
    %cst_58 = arith.constant 0xFF800000 : f32
    %88 = vector.broadcast %cst_58 : f32 to vector<16x128xf32>
    %89 = arith.select %87, %88, %85 : vector<16x128xi1>, vector<16x128xf32>
    %c15_i32_59 = arith.constant 15 : i32
    %90 = tpu.dynamic_rotate %84 by %c15_i32_59 dim 0 : vector<16x128xf32>, i32 -> vector<16x128xf32>
    %c15_i32_60 = arith.constant 15 : i32
    %91 = vector.broadcast %c15_i32_60 : i32 to vector<16x128xi32>
    %92 = arith.cmpi eq, %1, %91 : vector<16x128xi32>
    %cst_61 = arith.constant 0xFF800000 : f32
    %93 = vector.broadcast %cst_61 : f32 to vector<16x128xf32>
    %94 = arith.select %92, %93, %90 : vector<16x128xi1>, vector<16x128xf32>
    %95 = arith.maximumf %89, %94 : vector<16x128xf32>
    %96 = arith.maximumf %84, %95 : vector<16x128xf32>
    %c0_62 = arith.constant 0 : index
    %c0_63 = arith.constant 0 : index
    %c0_64 = arith.constant 0 : index
    %97 = vector.load %arg6[%c0_62, %c0_63, %c0_64] : memref<1x16x128xf32, #tpu.memory_space<vmem>>, vector<1x16x128xf32>
    %98 = vector.shape_cast %97 : vector<1x16x128xf32> to vector<16x128xf32>
    %99 = vector.shape_cast %96 : vector<16x128xf32> to vector<1x16x128xf32>
    tpu.vector_store %arg6[%c0_62, %c0_63, %c0_64], %99 {strides = array<i32>} : memref<1x16x128xf32, #tpu.memory_space<vmem>>, vector<1x16x128xf32>,
    return
  }
  func.func @transform_0(%arg0: i32) -> (i32, i32, i32) {
    %c0_i32 = arith.constant 0 : i32
    %c0_i32_0 = arith.constant 0 : i32
    %c0_i32_1 = arith.constant 0 : i32
    return %arg0, %c0_i32, %c0_i32_0 : i32, i32, i32
  }
  func.func @transform_1(%arg0: i32) -> (i32, i32, i32) {
    %c0_i32 = arith.constant 0 : i32
    %c0_i32_0 = arith.constant 0 : i32
    %c0_i32_1 = arith.constant 0 : i32
    %c0_i32_2 = arith.constant 0 : i32
    return %c0_i32, %c0_i32_0, %c0_i32_1 : i32, i32, i32
  }
  func.func @transform_2(%arg0: i32) -> (i32, i32, i32) {
    %c0_i32 = arith.constant 0 : i32
    %c0_i32_0 = arith.constant 0 : i32
    %c0_i32_1 = arith.constant 0 : i32
    %c0_i32_2 = arith.constant 0 : i32
    return %c0_i32, %c0_i32_0, %c0_i32_1 : i32, i32, i32
  }
  func.func @transform_3(%arg0: i32) -> (i32, i32, i32) {
    %c0_i32 = arith.constant 0 : i32
    %c0_i32_0 = arith.constant 0 : i32
    %c0_i32_1 = arith.constant 0 : i32
    %c0_i32_2 = arith.constant 0 : i32
    return %c0_i32, %c0_i32_0, %c0_i32_1 : i32, i32, i32
  }
  func.func @transform_4(%arg0: i32) -> (i32, i32) {
    %c0_i32 = arith.constant 0 : i32
    %c0_i32_0 = arith.constant 0 : i32
    %c0_i32_1 = arith.constant 0 : i32
    return %c0_i32, %c0_i32_0 : i32, i32
  }
  func.func @transform_5(%arg0: i32) -> (i32, i32, i32) {
    %c0_i32 = arith.constant 0 : i32
    %c0_i32_0 = arith.constant 0 : i32
    %c0_i32_1 = arith.constant 0 : i32
    return %arg0, %c0_i32, %c0_i32_0 : i32, i32, i32
  }
}

</mosaic_0001>

<llo_original>
// kernel: tpu_custom_call.1
$region0: #{tpu_custom_call.1}
  #allocation0 [shape = 'u32[]', space=smem, size = 0x4, offset = 0x4, fixed_abs, tag = 'smem constant byte address 0x4 - core index']
  #allocation1 [shape = 'u32[144,128]{1,0:T(1,128)}', space=vmem, size = 0x12000, scoped, tag = 'internal scratch']
  %s0 = inlined_call_operand.hbm [shape: f32[2,16,64], index: 0, kind: input, shape index: {}]
  %s1 = inlined_call_operand.hbm [shape: f32[3,64,128], index: 1, kind: input, shape index: {}]
  %s2 = inlined_call_operand.hbm [shape: f32[3,128,128], index: 2, kind: input, shape index: {}]
  %s3 = inlined_call_operand.hbm [shape: f32[3,64,128], index: 3, kind: input, shape index: {}]
  %s4 = inlined_call_operand.vmem [shape: f32[2,128], index: 4, kind: input, shape index: {}]
  %s5 = inlined_call_operand.hbm [shape: f32[2,16,128], index: 5, kind: output, shape index: {}]
  %s6 = sld [smem:[#allocation0]]
  $region69: #{tpu_custom_call.1} parent=0
    _
  %s8 = ssub.s32 1, %s6
  %s9 = scalar_select 0, %s8, %s6
  $region1: #{tpu_custom_call.1} parent=0
    #allocation2 [shape = 'u8[16384]{0}', space=vmem, size = 0x4000, scoped, tag = 'input window, operand 0']
    #allocation3 [shape = 's32[2]{0}', space=sflag, size = 0x8, scoped, tag = 'scoped memory for tpu_custom_call.1']
    #allocation4 [shape = 's32[2]{0}', space=sflag, size = 0x8, scoped, tag = 'scoped memory for tpu_custom_call.1']
    #allocation5 [shape = 'u8[98304]{0}', space=vmem, size = 0x18000, scoped, tag = 'input window, operand 1, single buffered']
    #allocation6 [shape = 's32[1]{0}', space=sflag, size = 0x4, scoped, tag = 'scoped memory for tpu_custom_call.1']
    #allocation7 [shape = 'u8[196608]{0}', space=vmem, size = 0x30000, scoped, tag = 'input window, operand 2, single buffered']
    #allocation8 [shape = 'u8[98304]{0}', space=vmem, size = 0x18000, scoped, tag = 'input window, operand 3, single buffered']
    #allocation9 [shape = 's32[1]{0}', space=sflag, size = 0x4, scoped, tag = 'scoped memory for tpu_custom_call.1']
    #allocation10 [shape = 'u8[16384]{0}', space=vmem, size = 0x4000, scoped, tag = 'output window, operand 0']
    %10 = vsyncpa [#allocation3], 0
    %s11 = scalar_lea.sflag [#allocation3], 1
    %12 = vsyncpa %s11, 0
    %13 = vsyncpa [#allocation6], 0
    %14 = vsyncpa [#allocation9], 0
    %15 = vsyncpa [#allocation4], 0
    %s16 = scalar_lea.sflag [#allocation4], 1
    %17 = vsyncpa %s16, 0
    loop: start=0, step=1, limit=4
    $region2: #{tpu_custom_call.1} parent=1 // loop_pre_header
      _
    $region3: #{tpu_custom_call.1} parent=1 // loop_header
      %s19 = sphi 0, %s23
      %p20 = scmp.ge.s32.totalorder %s19, 4
      %s29 = sphi 0, %s31
      %s32 = sphi 0, %s29
      %s33 = sphi 0, %s32
      %s49 = sphi 0, %s33
      %s53 = sphi 0, %s53
      %s55 = sphi 0, %s53
      %s56 = sphi 0, %s55
      %s70 = sphi 0, %s56
      %s74 = sphi 0, %s74
      %s76 = sphi 0, %s74
      %s77 = sphi 0, %s76
      %s91 = sphi 0, %s77
      %s95 = sphi 0, %s95
      %s97 = sphi 0, %s95
      %s98 = sphi 0, %s97
      %s112 = sphi 0, %s98
      %s116 = sphi 0, %s116
      %s118 = sphi 0, %s116
      %s119 = sphi 0, %s118
      %s133 = sphi 0, %s119
      %s139 = sphi 0, %s141
      %s142 = sphi 0, %s139
      %s143 = sphi 0, %s142
      %s159 = sphi 0, %s143
    $region4: #{tpu_custom_call.1} parent=1 // loop_header_branch
      %22 = sbr.rel (%p20) target = $region8
    $region5: #{tpu_custom_call.1} parent=1 // loop_body
      %s24 = ssub.s32 %s19, 1
      %s25 = ssub.s32 %s19, 2
      %s26 = sadd.s32 %s19, 1
      %s27 = ssub.s32 %s19, %s26
      %p28 = scmp.eq.s32.totalorder %s27, 0
      %s30 = sadd.s32 %s29, 1
      %s31 = scalar_select %p28, %s29, %s30
      %p34 = pneg %p28
      %p35 = scmp.eq.s32.totalorder %s19, 1
      %p36 = por %p34, %p35
      %p37 = scmp.ne.s32.totalorder %s29, %s32
      %p38 = scmp.eq.s32.totalorder %s19, 0
      %p39 = por %p37, %p38
      %p40 = scmp.ne.s32.totalorder %s29, %s32
      %p41 = scmp.eq.s32.totalorder %s24, 1
      %p42 = por %p40, %p41
      %p43 = scmp.ne.s32.totalorder %s32, %s33
      %p44 = scmp.eq.s32.totalorder %s24, 0
      %p45 = por %p43, %p44
      %p46 = scmp.ne.s32.totalorder %s32, %s33
      %p47 = scmp.eq.s32.totalorder %s25, 1
      %p48 = por %p46, %p47
      %p50 = scmp.ne.s32.totalorder %s33, %s49
      %p51 = scmp.eq.s32.totalorder %s25, 0
      %p52 = por %p50, %p51
      %s54 = sadd.s32 %s53, 1
      %p57 = scmp.eq.s32.totalorder %s19, 1
      %p58 = scmp.ne.s32.totalorder %s53, %s55
      %p59 = scmp.eq.s32.totalorder %s19, 0
      %p60 = por %p58, %p59
      %p61 = scmp.ne.s32.totalorder %s53, %s55
      %p62 = scmp.eq.s32.totalorder %s24, 1
      %p63 = por %p61, %p62
      %p64 = scmp.ne.s32.totalorder %s55, %s56
      %p65 = scmp.eq.s32.totalorder %s24, 0
      %p66 = por %p64, %p65
      %p67 = scmp.ne.s32.totalorder %s55, %s56
      %p68 = scmp.eq.s32.totalorder %s25, 1
      %p69 = por %p67, %p68
      %p71 = scmp.ne.s32.totalorder %s56, %s70
      %p72 = scmp.eq.s32.totalorder %s25, 0
      %p73 = por %p71, %p72
      %s75 = sadd.s32 %s74, 1
      %p78 = scmp.eq.s32.totalorder %s19, 1
      %p79 = scmp.ne.s32.totalorder %s74, %s76
      %p80 = scmp.eq.s32.totalorder %s19, 0
      %p81 = por %p79, %p80
      %p82 = scmp.ne.s32.totalorder %s74, %s76
      %p83 = scmp.eq.s32.totalorder %s24, 1
      %p84 = por %p82, %p83
      %p85 = scmp.ne.s32.totalorder %s76, %s77
      %p86 = scmp.eq.s32.totalorder %s24, 0
      %p87 = por %p85, %p86
      %p88 = scmp.ne.s32.totalorder %s76, %s77
      %p89 = scmp.eq.s32.totalorder %s25, 1
      %p90 = por %p88, %p89
      %p92 = scmp.ne.s32.totalorder %s77, %s91
      %p93 = scmp.eq.s32.totalorder %s25, 0
      %p94 = por %p92, %p93
      %s96 = sadd.s32 %s95, 1
      %p99 = scmp.eq.s32.totalorder %s19, 1
      %p100 = scmp.ne.s32.totalorder %s95, %s97
      %p101 = scmp.eq.s32.totalorder %s19, 0
      %p102 = por %p100, %p101
      %p103 = scmp.ne.s32.totalorder %s95, %s97
      %p104 = scmp.eq.s32.totalorder %s24, 1
      %p105 = por %p103, %p104
      %p106 = scmp.ne.s32.totalorder %s97, %s98
      %p107 = scmp.eq.s32.totalorder %s24, 0
      %p108 = por %p106, %p107
      %p109 = scmp.ne.s32.totalorder %s97, %s98
      %p110 = scmp.eq.s32.totalorder %s25, 1
      %p111 = por %p109, %p110
      %p113 = scmp.ne.s32.totalorder %s98, %s112
      %p114 = scmp.eq.s32.totalorder %s25, 0
      %p115 = por %p113, %p114
      %s117 = sadd.s32 %s116, 1
      %p120 = scmp.eq.s32.totalorder %s19, 1
      %p121 = scmp.ne.s32.totalorder %s116, %s118
      %p122 = scmp.eq.s32.totalorder %s19, 0
      %p123 = por %p121, %p122
      %p124 = scmp.ne.s32.totalorder %s116, %s118
      %p125 = scmp.eq.s32.totalorder %s24, 1
      %p126 = por %p124, %p125
      %p127 = scmp.ne.s32.totalorder %s118, %s119
      %p128 = scmp.eq.s32.totalorder %s24, 0
      %p129 = por %p127, %p128
      %p130 = scmp.ne.s32.totalorder %s118, %s119
      %p131 = scmp.eq.s32.totalorder %s25, 1
      %p132 = por %p130, %p131
      %p134 = scmp.ne.s32.totalorder %s119, %s133
      %p135 = scmp.eq.s32.totalorder %s25, 0
      %p136 = por %p134, %p135
      %s137 = ssub.s32 %s19, %s26
      %p138 = scmp.eq.s32.totalorder %s137, 0
      %s140 = sadd.s32 %s139, 1
      %s141 = scalar_select %p138, %s139, %s140
      %p144 = pneg %p138
      %p145 = scmp.eq.s32.totalorder %s19, 1
      %p146 = por %p144, %p145
      %p147 = scmp.ne.s32.totalorder %s139, %s142
      %p148 = scmp.eq.s32.totalorder %s19, 0
      %p149 = por %p147, %p148
      %p150 = scmp.ne.s32.totalorder %s139, %s142
      %p151 = scmp.eq.s32.totalorder %s24, 1
      %p152 = por %p150, %p151
      %p153 = scmp.ne.s32.totalorder %s142, %s143
      %p154 = scmp.eq.s32.totalorder %s24, 0
      %p155 = por %p153, %p154
      %p156 = scmp.ne.s32.totalorder %s142, %s143
      %p157 = scmp.eq.s32.totalorder %s25, 1
      %p158 = por %p156, %p157
      %p160 = scmp.ne.s32.totalorder %s143, %s159
      %p161 = scmp.eq.s32.totalorder %s25, 0
      %p162 = por %p160, %p161
      %p163 = scmp.le.s32.totalorder 1, %s19
      %p164 = scmp.lt.s32.totalorder %s19, 3
      %p165 = pnand %p163, %p164
      %p166 = pneg %p165
      // Predicated region
      $region9: #{tpu_custom_call.1} parent=5 // pred_check
        _
      $region10: #{tpu_custom_call.1} parent=5 // pred_check_branch
        %168 = sbr.rel (%p165) target = $region12
      $region11: #{tpu_custom_call.1} parent=5 // pred_region
        %s169 = ssub.s32 %s19, 1
        // Predicated region
        $region13: #{tpu_custom_call.1} parent=11 // pred_check
          %p170 = pneg %p66
        $region14: #{tpu_custom_call.1} parent=11 // pred_check_branch
          %172 = sbr.rel (%p170) target = $region16
        $region15: #{tpu_custom_call.1} parent=11 // pred_region
          %s174 = ssub.s32 3072, 3072
          %175 = vsyncadd [#allocation6], %s174
          %s176 = sshll.u32 [#allocation5], 4
          %s177 = int_to_ptr.vmem [resolvable:$true] %s176
          %182 = dma.hbm_to_vmem [thread:$0]  %s1, 3072, %s177, [#allocation6], 128, 128, 8
        $region16: #{tpu_custom_call.1} parent=11 // pred_fallthru
          _
        // Predicated region
        $region17: #{tpu_custom_call.1} parent=11 // pred_check
          %p183 = pneg %p87
        $region18: #{tpu_custom_call.1} parent=11 // pred_check_branch
          %185 = sbr.rel (%p183) target = $region20
        $region19: #{tpu_custom_call.1} parent=11 // pred_region
          %s187 = ssub.s32 6144, 6144
          %188 = vsyncadd [#allocation6], %s187
          %s189 = sshll.u32 [#allocation7], 4
          %s190 = int_to_ptr.vmem [resolvable:$true] %s189
          %195 = dma.hbm_to_vmem [thread:$0]  %s2, 6144, %s190, [#allocation6], 128, 128, 8
        $region20: #{tpu_custom_call.1} parent=11 // pred_fallthru
          _
        // Predicated region
        $region21: #{tpu_custom_call.1} parent=11 // pred_check
          %p196 = pneg %p108
        $region22: #{tpu_custom_call.1} parent=11 // pred_check_branch
          %198 = sbr.rel (%p196) target = $region24
        $region23: #{tpu_custom_call.1} parent=11 // pred_region
          %s200 = ssub.s32 3072, 3072
          %201 = vsyncadd [#allocation9], %s200
          %s202 = sshll.u32 [#allocation8], 4
          %s203 = int_to_ptr.vmem [resolvable:$true] %s202
          %208 = dma.hbm_to_vmem [thread:$0]  %s3, 3072, %s203, [#allocation9], 128, 128, 8
        $region24: #{tpu_custom_call.1} parent=11 // pred_fallthru
          _
        // Predicated region
        $region25: #{tpu_custom_call.1} parent=11 // pred_check
          %p209 = pneg %p129
        $region26: #{tpu_custom_call.1} parent=11 // pred_check_branch
          %211 = sbr.rel (%p209) target = $region28
        $region27: #{tpu_custom_call.1} parent=11 // pred_region
          _
        $region28: #{tpu_custom_call.1} parent=11 // pred_fallthru
          _
      $region12: #{tpu_custom_call.1} parent=5 // pred_fallthru
        _
      %p212 = scmp.lt.s32.totalorder %s19, 2
      // Predicated region
      $region29: #{tpu_custom_call.1} parent=5 // pred_check
        %p213 = pneg %p212
      $region30: #{tpu_custom_call.1} parent=5 // pred_check_branch
        %215 = sbr.rel (%p213) target = $region32
      $region31: #{tpu_custom_call.1} parent=5 // pred_region
        // Predicated region
        $region33: #{tpu_custom_call.1} parent=31 // pred_check
          %p216 = pneg %p39
        $region34: #{tpu_custom_call.1} parent=31 // pred_check_branch
          %218 = sbr.rel (%p216) target = $region36
        $region35: #{tpu_custom_call.1} parent=31 // pred_region
          %s219 = sand.u32 %s29, 1
          %s220 = scalar_lea.sflag [#allocation3], %s219
          %s221 = sand.u32 %s29, 1
          %s222 = smul.addr %s221, 16
          %s223 = scalar_lea.vmem [#allocation2], %s222
          %s225 = ssub.s32 256, 256
          %226 = vsyncadd %s220, %s225
          %s227 = smul.addr %s19, 2
          %s228 = smul.addr %s227, 128
          %s229 = scalar_lea.hbm %s0, %s228
          %s230 = sshll.u32 %s223, 4
          %s231 = int_to_ptr.vmem [resolvable:$true] %s230
          %236 = dma.hbm_to_vmem [thread:$0]  %s229, 256, %s231, %s220, 128, 128, 8
        $region36: #{tpu_custom_call.1} parent=31 // pred_fallthru
          _
      $region32: #{tpu_custom_call.1} parent=5 // pred_fallthru
        _
      %p237 = scmp.le.s32.totalorder 1, %s19
      %p238 = scmp.lt.s32.totalorder %s19, 3
      %p239 = pnand %p237, %p238
      %p240 = pneg %p239
      // Predicated region
      $region37: #{tpu_custom_call.1} parent=5 // pred_check
        _
      $region38: #{tpu_custom_call.1} parent=5 // pred_check_branch
        %242 = sbr.rel (%p239) target = $region40
      $region39: #{tpu_custom_call.1} parent=5 // pred_region
        %s243 = ssub.s32 %s19, 1
        %s244 = sand.u32 %s32, 1
        %s245 = scalar_lea.sflag [#allocation3], %s244
        %s246 = sand.u32 %s32, 1
        %s247 = smul.addr %s246, 16
        %s248 = scalar_lea.vmem [#allocation2], %s247
        // Predicated region
        $region41: #{tpu_custom_call.1} parent=39 // pred_check
          %p249 = pneg %p45
        $region42: #{tpu_custom_call.1} parent=39 // pred_check_branch
          %251 = sbr.rel (%p249) target = $region44
        $region43: #{tpu_custom_call.1} parent=39 // pred_region
          %252 = dma.done %s245, 256
        $region44: #{tpu_custom_call.1} parent=39 // pred_fallthru
          _
        // Predicated region
        $region45: #{tpu_custom_call.1} parent=39 // pred_check
          %p253 = pneg %p66
        $region46: #{tpu_custom_call.1} parent=39 // pred_check_branch
          %255 = sbr.rel (%p253) target = $region48
        $region47: #{tpu_custom_call.1} parent=39 // pred_region
          %256 = dma.done [#allocation6], 3072
        $region48: #{tpu_custom_call.1} parent=39 // pred_fallthru
          _
        // Predicated region
        $region49: #{tpu_custom_call.1} parent=39 // pred_check
          %p257 = pneg %p87
        $region50: #{tpu_custom_call.1} parent=39 // pred_check_branch
          %259 = sbr.rel (%p257) target = $region52
        $region51: #{tpu_custom_call.1} parent=39 // pred_region
          %260 = dma.done [#allocation6], 6144
        $region52: #{tpu_custom_call.1} parent=39 // pred_fallthru
          _
        // Predicated region
        $region53: #{tpu_custom_call.1} parent=39 // pred_check
          %p261 = pneg %p108
        $region54: #{tpu_custom_call.1} parent=39 // pred_check_branch
          %263 = sbr.rel (%p261) target = $region56
        $region55: #{tpu_custom_call.1} parent=39 // pred_region
          %264 = dma.done [#allocation9], 3072
        $region56: #{tpu_custom_call.1} parent=39 // pred_fallthru
          _
        %s265 = sand.u32 %s32, 1
        %s266 = scalar_lea.sflag [#allocation3], %s265
        %s267 = sand.u32 %s32, 1
        %s268 = smul.addr %s267, 16
        %s269 = scalar_lea.vmem [#allocation2], %s268
        %p270 = pneg %p45
        %p271 = pneg %p42
        %p272 = pneg %p66
        %p273 = pneg %p63
        %p274 = pneg %p87
        %p275 = pneg %p84
        %p276 = pneg %p108
        %p277 = pneg %p105
        %p278 = pneg %p129
        %p279 = pneg %p126
        %p280 = pneg %p155
        %p281 = pneg %p152
        %s282 = sand.u32 %s142, 1
        %s283 = scalar_lea.sflag [#allocation4], %s282
        %s284 = sand.u32 %s142, 1
        %s285 = smul.addr %s284, 16
        %s286 = scalar_lea.vmem [#allocation10], %s285
        %v287 = vlaneseq
        %v288 = vshrl.u32 %v287, 7
        %v289 = vadd.s32 %v288, 8
        %v290 = vld [vmem:[%s248] sm:$0xff]
        %v291 = vld [vmem:[%s248 + $0x8] sm:$0xff]
        %v292 = vrot.slane %v290, 7
        %v293 = vrot.slane %v291, 7
        %vm294 = vcmp.lt.s32.totalorder %v288, 1
        %v295 = vsel %vm294, %v292, %v293
        %v296 = vsel %vm294, %v293, %v292
        %vm297 = vcmp.eq.s32.totalorder %v288, 0
        %vm298 = vcmp.eq.s32.totalorder %v289, 0
        %v299 = vsel %vm297, 0.0, %v296
        %v300 = vsel %vm298, 0.0, %v295
        %v301 = vrot.slane %v290, 1
        %v302 = vrot.slane %v291, 1
        %vm303 = vcmp.lt.s32.totalorder %v288, 7
        %v304 = vsel %vm303, %v301, %v302
        %v305 = vsel %vm303, %v302, %v301
        %vm306 = vcmp.eq.s32.totalorder %v288, 15
        %vm307 = vcmp.eq.s32.totalorder %v289, 15
        %v308 = vsel %vm306, 0.0, %v304
        %v309 = vsel %vm307, 0.0, %v305
        %v310 = vld [vmem:[#allocation5] sm:$0xff]
        %v311 = vld [vmem:[#allocation5 + $0x8] sm:$0xff]
        %v312 = vld [vmem:[#allocation5 + $0x10] sm:$0xff]
        %v313 = vld [vmem:[#allocation5 + $0x18] sm:$0xff]
        %v314 = vld [vmem:[#allocation5 + $0x20] sm:$0xff]
        %v315 = vld [vmem:[#allocation5 + $0x28] sm:$0xff]
        %v316 = vld [vmem:[#allocation5 + $0x30] sm:$0xff]
        %v317 = vld [vmem:[#allocation5 + $0x38] sm:$0xff]
        %v318 = vld [vmem:[#allocation8] sm:$0xff]
        %v319 = vld [vmem:[#allocation8 + $0x8] sm:$0xff]
        %v320 = vld [vmem:[#allocation8 + $0x10] sm:$0xff]
        %v321 = vld [vmem:[#allocation8 + $0x18] sm:$0xff]
        %v322 = vld [vmem:[#allocation8 + $0x20] sm:$0xff]
        %v323 = vld [vmem:[#allocation8 + $0x28] sm:$0xff]
        %v324 = vld [vmem:[#allocation8 + $0x30] sm:$0xff]
        %v325 = vld [vmem:[#allocation8 + $0x38] sm:$0xff]
        %s326 = scalar_lea.vmem [#allocation5], 64
        %v327 = vld [vmem:[%s326] sm:$0xff]
        %v328 = vld [vmem:[%s326 + $0x8] sm:$0xff]
        %v329 = vld [vmem:[%s326 + $0x10] sm:$0xff]
        %v330 = vld [vmem:[%s326 + $0x18] sm:$0xff]
        %v331 = vld [vmem:[%s326 + $0x20] sm:$0xff]
        %v332 = vld [vmem:[%s326 + $0x28] sm:$0xff]
        %v333 = vld [vmem:[%s326 + $0x30] sm:$0xff]
        %v334 = vld [vmem:[%s326 + $0x38] sm:$0xff]
        %vm335 = vcmask 523264
        %v337 = vsel %vm335, %v290, 0
        %v340 = vsel %vm335, %v291, 0
        %342 = vmatprep.subr.mxu0 0.0
        %343 = vmatpush1.msra.mxu0 %v327
        %344 = vmatprep.subr.mxu0 0.0
        %345 = vmatpush1.msra.mxu0 %v328
        %346 = vmatprep.subr.mxu0 0.0
        %347 = vmatpush1.msra.mxu0 %v329
        %348 = vmatprep.subr.mxu0 0.0
        %349 = vmatpush1.msra.mxu0 %v330
        %350 = vmatprep.subr.mxu0 0.0
        %351 = vmatpush1.msra.mxu0 %v331
        %352 = vmatprep.subr.mxu0 0.0
        %353 = vmatpush1.msra.mxu0 %v332
        %354 = vmatprep.subr.mxu0 0.0
        %355 = vmatpush1.msra.mxu0 %v333
        %356 = vmatprep.subr.mxu0 0.0
        %357 = vmatpush1.msra.mxu0 %v334
        %358 = vmatprep.subr.mxu0 0.0
        %359 = vmatpush1.msra.mxu0 0.0
        %360 = vmatprep.subr.mxu0 0.0
        %361 = vmatpush1.msra.mxu0 0.0
        %362 = vmatprep.subr.mxu0 0.0
        %363 = vmatpush1.msra.mxu0 0.0
        %364 = vmatprep.subr.mxu0 0.0
        %365 = vmatpush1.msra.mxu0 0.0
        %366 = vmatprep.subr.mxu0 0.0
        %367 = vmatpush1.msra.mxu0 0.0
        %368 = vmatprep.subr.mxu0 0.0
        %369 = vmatpush1.msra.mxu0 0.0
        %370 = vmatprep.subr.mxu0 0.0
        %371 = vmatpush1.msra.mxu0 0.0
        %372 = vmatprep.subr.mxu0 0.0
        %373 = vmatpush1.msra.mxu0 0.0
        %374 = vmatprep.subr.mxu0 0.0
        %375 = vmatpush1.msra.mxu0 0.0
        %376 = vmatprep.subr.mxu0 0.0
        %377 = vmatpush1.msra.mxu0 0.0
        %378 = vmatprep.subr.mxu0 0.0
        %379 = vmatpush1.msra.mxu0 0.0
        %380 = vmatprep.subr.mxu0 0.0
        %381 = vmatpush1.msra.mxu0 0.0
        %382 = vmatprep.subr.mxu0 0.0
        %383 = vmatpush1.msra.mxu0 0.0
        %384 = vmatprep.subr.mxu0 0.0
        %385 = vmatpush1.msra.mxu0 0.0
        %386 = vmatprep.subr.mxu0 0.0
        %387 = vmatpush1.msra.mxu0 0.0
        %388 = vmatprep.subr.mxu0 0.0
        %389 = vmatpush1.msra.mxu0 0.0
        %390 = vmatprep.subr.mxu0 0.0
        %391 = vmatpush1.msra.mxu0 0.0
        %392 = vmatprep.subr.mxu0 0.0
        %393 = vmatpush1.msra.mxu0 0.0
        %394 = vmatprep.subr.mxu0 0.0
        %395 = vmatpush1.msra.mxu0 0.0
        %396 = vmatprep.subr.mxu0 0.0
        %397 = vmatpush1.msra.mxu0 0.0
        %398 = vmatprep.subr.mxu0 0.0
        %399 = vmatpush1.msra.mxu0 0.0
        %400 = vmatprep.subr.mxu0 0.0
        %401 = vmatpush1.msra.mxu0 0.0
        %402 = vmatprep.subr.mxu0 0.0
        %403 = vmatpush1.msra.mxu0 0.0
        %404 = vmatprep.subr.mxu0 0.0
        %405 = vmatpush1.msra.mxu0 0.0
        %406 = vmatprep.mubr.f32.mxu0 0.0
        %407 = vmatmul.mubr.f32.gmra.mrb[0].mxu0 %v337
        %v408 = vpop.f32.mrb[0].mxu0
        %v409 = vadd.f32 0.0, %v408
        %v410 = vpop.f32.mrb[0].mxu0
        %411 = vmatprep.mubr.f32.mxu0 0.0
        %412 = vmatmul.mubr.f32.gmra.mrb[0].mxu0 %v340
        %v413 = vpop.f32.mrb[0].mxu0
        %v414 = vadd.f32 0.0, %v413
        %v415 = vpop.f32.mrb[0].mxu0
        %416 = vdwg.mxu0
        %v418 = vsel %vm335, %v299, 0
        %v421 = vsel %vm335, %v300, 0
        %423 = vmatprep.subr.mxu0 0.0
        %424 = vmatpush1.msra.mxu0 %v310
        %425 = vmatprep.subr.mxu0 0.0
        %426 = vmatpush1.msra.mxu0 %v311
        %427 = vmatprep.subr.mxu0 0.0
        %428 = vmatpush1.msra.mxu0 %v312
        %429 = vmatprep.subr.mxu0 0.0
        %430 = vmatpush1.msra.mxu0 %v313
        %431 = vmatprep.subr.mxu0 0.0
        %432 = vmatpush1.msra.mxu0 %v314
        %433 = vmatprep.subr.mxu0 0.0
        %434 = vmatpush1.msra.mxu0 %v315
        %435 = vmatprep.subr.mxu0 0.0
        %436 = vmatpush1.msra.mxu0 %v316
        %437 = vmatprep.subr.mxu0 0.0
        %438 = vmatpush1.msra.mxu0 %v317
        %439 = vmatprep.subr.mxu0 0.0
        %440 = vmatpush1.msra.mxu0 0.0
        %441 = vmatprep.subr.mxu0 0.0
        %442 = vmatpush1.msra.mxu0 0.0
        %443 = vmatprep.subr.mxu0 0.0
        %444 = vmatpush1.msra.mxu0 0.0
        %445 = vmatprep.subr.mxu0 0.0
        %446 = vmatpush1.msra.mxu0 0.0
        %447 = vmatprep.subr.mxu0 0.0
        %448 = vmatpush1.msra.mxu0 0.0
        %449 = vmatprep.subr.mxu0 0.0
        %450 = vmatpush1.msra.mxu0 0.0
        %451 = vmatprep.subr.mxu0 0.0
        %452 = vmatpush1.msra.mxu0 0.0
        %453 = vmatprep.subr.mxu0 0.0
        %454 = vmatpush1.msra.mxu0 0.0
        %455 = vmatprep.subr.mxu0 0.0
        %456 = vmatpush1.msra.mxu0 0.0
        %457 = vmatprep.subr.mxu0 0.0
        %458 = vmatpush1.msra.mxu0 0.0
        %459 = vmatprep.subr.mxu0 0.0
        %460 = vmatpush1.msra.mxu0 0.0
        %461 = vmatprep.subr.mxu0 0.0
        %462 = vmatpush1.msra.mxu0 0.0
        %463 = vmatprep.subr.mxu0 0.0
        %464 = vmatpush1.msra.mxu0 0.0
        %465 = vmatprep.subr.mxu0 0.0
        %466 = vmatpush1.msra.mxu0 0.0
        %467 = vmatprep.subr.mxu0 0.0
        %468 = vmatpush1.msra.mxu0 0.0
        %469 = vmatprep.subr.mxu0 0.0
        %470 = vmatpush1.msra.mxu0 0.0
        %471 = vmatprep.subr.mxu0 0.0
        %472 = vmatpush1.msra.mxu0 0.0
        %473 = vmatprep.subr.mxu0 0.0
        %474 = vmatpush1.msra.mxu0 0.0
        %475 = vmatprep.subr.mxu0 0.0
        %476 = vmatpush1.msra.mxu0 0.0
        %477 = vmatprep.subr.mxu0 0.0
        %478 = vmatpush1.msra.mxu0 0.0
        %479 = vmatprep.subr.mxu0 0.0
        %480 = vmatpush1.msra.mxu0 0.0
        %481 = vmatprep.subr.mxu0 0.0
        %482 = vmatpush1.msra.mxu0 0.0
        %483 = vmatprep.subr.mxu0 0.0
        %484 = vmatpush1.msra.mxu0 0.0
        %485 = vmatprep.subr.mxu0 0.0
        %486 = vmatpush1.msra.mxu0 0.0
        %487 = vmatprep.mubr.f32.mxu0 0.0
        %488 = vmatmul.mubr.f32.gmra.mrb[0].mxu0 %v418
        %v489 = vpop.f32.mrb[0].mxu0
        %v490 = vadd.f32 %v409, %v489
        %v491 = vpop.f32.mrb[0].mxu0
        %492 = vmatprep.mubr.f32.mxu0 0.0
        %493 = vmatmul.mubr.f32.gmra.mrb[0].mxu0 %v421
        %v494 = vpop.f32.mrb[0].mxu0
        %v495 = vadd.f32 %v414, %v494
        %v496 = vpop.f32.mrb[0].mxu0
        %497 = vdwg.mxu0
        %s498 = scalar_lea.vmem [#allocation8], 64
        %v499 = vld [vmem:[%s498] sm:$0xff]
        %v500 = vld [vmem:[%s498 + $0x8] sm:$0xff]
        %v501 = vld [vmem:[%s498 + $0x10] sm:$0xff]
        %v502 = vld [vmem:[%s498 + $0x18] sm:$0xff]
        %v503 = vld [vmem:[%s498 + $0x20] sm:$0xff]
        %v504 = vld [vmem:[%s498 + $0x28] sm:$0xff]
        %v505 = vld [vmem:[%s498 + $0x30] sm:$0xff]
        %v506 = vld [vmem:[%s498 + $0x38] sm:$0xff]
        %507 = vmatprep.subr.mxu0 0.0
        %508 = vmatpush1.msra.mxu0 %v499
        %509 = vmatprep.subr.mxu0 0.0
        %510 = vmatpush1.msra.mxu0 %v500
        %511 = vmatprep.subr.mxu0 0.0
        %512 = vmatpush1.msra.mxu0 %v501
        %513 = vmatprep.subr.mxu0 0.0
        %514 = vmatpush1.msra.mxu0 %v502
        %515 = vmatprep.subr.mxu0 0.0
        %516 = vmatpush1.msra.mxu0 %v503
        %517 = vmatprep.subr.mxu0 0.0
        %518 = vmatpush1.msra.mxu0 %v504
        %519 = vmatprep.subr.mxu0 0.0
        %520 = vmatpush1.msra.mxu0 %v505
        %521 = vmatprep.subr.mxu0 0.0
        %522 = vmatpush1.msra.mxu0 %v506
        %523 = vmatprep.subr.mxu0 0.0
        %524 = vmatpush1.msra.mxu0 0.0
        %525 = vmatprep.subr.mxu0 0.0
        %526 = vmatpush1.msra.mxu0 0.0
        %527 = vmatprep.subr.mxu0 0.0
        %528 = vmatpush1.msra.mxu0 0.0
        %529 = vmatprep.subr.mxu0 0.0
        %530 = vmatpush1.msra.mxu0 0.0
        %531 = vmatprep.subr.mxu0 0.0
        %532 = vmatpush1.msra.mxu0 0.0
        %533 = vmatprep.subr.mxu0 0.0
        %534 = vmatpush1.msra.mxu0 0.0
        %535 = vmatprep.subr.mxu0 0.0
        %536 = vmatpush1.msra.mxu0 0.0
        %537 = vmatprep.subr.mxu0 0.0
        %538 = vmatpush1.msra.mxu0 0.0
        %539 = vmatprep.subr.mxu0 0.0
        %540 = vmatpush1.msra.mxu0 0.0
        %541 = vmatprep.subr.mxu0 0.0
        %542 = vmatpush1.msra.mxu0 0.0
        %543 = vmatprep.subr.mxu0 0.0
        %544 = vmatpush1.msra.mxu0 0.0
        %545 = vmatprep.subr.mxu0 0.0
        %546 = vmatpush1.msra.mxu0 0.0
        %547 = vmatprep.subr.mxu0 0.0
        %548 = vmatpush1.msra.mxu0 0.0
        %549 = vmatprep.subr.mxu0 0.0
        %550 = vmatpush1.msra.mxu0 0.0
        %551 = vmatprep.subr.mxu0 0.0
        %552 = vmatpush1.msra.mxu0 0.0
        %553 = vmatprep.subr.mxu0 0.0
        %554 = vmatpush1.msra.mxu0 0.0
        %555 = vmatprep.subr.mxu0 0.0
        %556 = vmatpush1.msra.mxu0 0.0
        %557 = vmatprep.subr.mxu0 0.0
        %558 = vmatpush1.msra.mxu0 0.0
        %559 = vmatprep.subr.mxu0 0.0
        %560 = vmatpush1.msra.mxu0 0.0
        %561 = vmatprep.subr.mxu0 0.0
        %562 = vmatpush1.msra.mxu0 0.0
        %563 = vmatprep.subr.mxu0 0.0
        %564 = vmatpush1.msra.mxu0 0.0
        %565 = vmatprep.subr.mxu0 0.0
        %566 = vmatpush1.msra.mxu0 0.0
        %567 = vmatprep.subr.mxu0 0.0
        %568 = vmatpush1.msra.mxu0 0.0
        %569 = vmatprep.subr.mxu0 0.0
        %570 = vmatpush1.msra.mxu0 0.0
        %571 = vmatprep.mubr.f32.mxu0 0.0
        %572 = vmatmul.mubr.f32.gmra.mrb[0].mxu0 %v337
        %v573 = vpop.f32.mrb[0].mxu0
        %v574 = vadd.f32 0.0, %v573
        %v575 = vpop.f32.mrb[0].mxu0
        %576 = vmatprep.mubr.f32.mxu0 0.0
        %577 = vmatmul.mubr.f32.gmra.mrb[0].mxu0 %v340
        %v578 = vpop.f32.mrb[0].mxu0
        %v579 = vadd.f32 0.0, %v578
        %v580 = vpop.f32.mrb[0].mxu0
        %581 = vdwg.mxu0
        %582 = vmatprep.subr.mxu0 0.0
        %583 = vmatpush1.msra.mxu0 %v318
        %584 = vmatprep.subr.mxu0 0.0
        %585 = vmatpush1.msra.mxu0 %v319
        %586 = vmatprep.subr.mxu0 0.0
        %587 = vmatpush1.msra.mxu0 %v320
        %588 = vmatprep.subr.mxu0 0.0
        %589 = vmatpush1.msra.mxu0 %v321
        %590 = vmatprep.subr.mxu0 0.0
        %591 = vmatpush1.msra.mxu0 %v322
        %592 = vmatprep.subr.mxu0 0.0
        %593 = vmatpush1.msra.mxu0 %v323
        %594 = vmatprep.subr.mxu0 0.0
        %595 = vmatpush1.msra.mxu0 %v324
        %596 = vmatprep.subr.mxu0 0.0
        %597 = vmatpush1.msra.mxu0 %v325
        %598 = vmatprep.subr.mxu0 0.0
        %599 = vmatpush1.msra.mxu0 0.0
        %600 = vmatprep.subr.mxu0 0.0
        %601 = vmatpush1.msra.mxu0 0.0
        %602 = vmatprep.subr.mxu0 0.0
        %603 = vmatpush1.msra.mxu0 0.0
        %604 = vmatprep.subr.mxu0 0.0
        %605 = vmatpush1.msra.mxu0 0.0
        %606 = vmatprep.subr.mxu0 0.0
        %607 = vmatpush1.msra.mxu0 0.0
        %608 = vmatprep.subr.mxu0 0.0
        %609 = vmatpush1.msra.mxu0 0.0
        %610 = vmatprep.subr.mxu0 0.0
        %611 = vmatpush1.msra.mxu0 0.0
        %612 = vmatprep.subr.mxu0 0.0
        %613 = vmatpush1.msra.mxu0 0.0
        %614 = vmatprep.subr.mxu0 0.0
        %615 = vmatpush1.msra.mxu0 0.0
        %616 = vmatprep.subr.mxu0 0.0
        %617 = vmatpush1.msra.mxu0 0.0
        %618 = vmatprep.subr.mxu0 0.0
        %619 = vmatpush1.msra.mxu0 0.0
        %620 = vmatprep.subr.mxu0 0.0
        %621 = vmatpush1.msra.mxu0 0.0
        %622 = vmatprep.subr.mxu0 0.0
        %623 = vmatpush1.msra.mxu0 0.0
        %624 = vmatprep.subr.mxu0 0.0
        %625 = vmatpush1.msra.mxu0 0.0
        %626 = vmatprep.subr.mxu0 0.0
        %627 = vmatpush1.msra.mxu0 0.0
        %628 = vmatprep.subr.mxu0 0.0
        %629 = vmatpush1.msra.mxu0 0.0
        %630 = vmatprep.subr.mxu0 0.0
        %631 = vmatpush1.msra.mxu0 0.0
        %632 = vmatprep.subr.mxu0 0.0
        %633 = vmatpush1.msra.mxu0 0.0
        %634 = vmatprep.subr.mxu0 0.0
        %635 = vmatpush1.msra.mxu0 0.0
        %636 = vmatprep.subr.mxu0 0.0
        %637 = vmatpush1.msra.mxu0 0.0
        %638 = vmatprep.subr.mxu0 0.0
        %639 = vmatpush1.msra.mxu0 0.0
        %640 = vmatprep.subr.mxu0 0.0
        %641 = vmatpush1.msra.mxu0 0.0
        %642 = vmatprep.subr.mxu0 0.0
        %643 = vmatpush1.msra.mxu0 0.0
        %644 = vmatprep.subr.mxu0 0.0
        %645 = vmatpush1.msra.mxu0 0.0
        %646 = vmatprep.mubr.f32.mxu0 0.0
        %647 = vmatmul.mubr.f32.gmra.mrb[0].mxu0 %v418
        %v648 = vpop.f32.mrb[0].mxu0
        %v649 = vadd.f32 %v574, %v648
        %v650 = vpop.f32.mrb[0].mxu0
        %651 = vmatprep.mubr.f32.mxu0 0.0
        %652 = vmatmul.mubr.f32.gmra.mrb[0].mxu0 %v421
        %v653 = vpop.f32.mrb[0].mxu0
        %v654 = vadd.f32 %v579, %v653
        %v655 = vpop.f32.mrb[0].mxu0
        %656 = vdwg.mxu0
        %s657 = scalar_lea.vmem [#allocation5], 128
        %v658 = vld [vmem:[%s657] sm:$0xff]
        %v659 = vld [vmem:[%s657 + $0x8] sm:$0xff]
        %v660 = vld [vmem:[%s657 + $0x10] sm:$0xff]
        %v661 = vld [vmem:[%s657 + $0x18] sm:$0xff]
        %v662 = vld [vmem:[%s657 + $0x20] sm:$0xff]
        %v663 = vld [vmem:[%s657 + $0x28] sm:$0xff]
        %v664 = vld [vmem:[%s657 + $0x30] sm:$0xff]
        %v665 = vld [vmem:[%s657 + $0x38] sm:$0xff]
        %v667 = vsel %vm335, %v308, 0
        %v670 = vsel %vm335, %v309, 0
        %672 = vmatprep.subr.mxu0 0.0
        %673 = vmatpush1.msra.mxu0 %v658
        %674 = vmatprep.subr.mxu0 0.0
        %675 = vmatpush1.msra.mxu0 %v659
        %676 = vmatprep.subr.mxu0 0.0
        %677 = vmatpush1.msra.mxu0 %v660
        %678 = vmatprep.subr.mxu0 0.0
        %679 = vmatpush1.msra.mxu0 %v661
        %680 = vmatprep.subr.mxu0 0.0
        %681 = vmatpush1.msra.mxu0 %v662
        %682 = vmatprep.subr.mxu0 0.0
        %683 = vmatpush1.msra.mxu0 %v663
        %684 = vmatprep.subr.mxu0 0.0
        %685 = vmatpush1.msra.mxu0 %v664
        %686 = vmatprep.subr.mxu0 0.0
        %687 = vmatpush1.msra.mxu0 %v665
        %688 = vmatprep.subr.mxu0 0.0
        %689 = vmatpush1.msra.mxu0 0.0
        %690 = vmatprep.subr.mxu0 0.0
        %691 = vmatpush1.msra.mxu0 0.0
        %692 = vmatprep.subr.mxu0 0.0
        %693 = vmatpush1.msra.mxu0 0.0
        %694 = vmatprep.subr.mxu0 0.0
        %695 = vmatpush1.msra.mxu0 0.0
        %696 = vmatprep.subr.mxu0 0.0
        %697 = vmatpush1.msra.mxu0 0.0
        %698 = vmatprep.subr.mxu0 0.0
        %699 = vmatpush1.msra.mxu0 0.0
        %700 = vmatprep.subr.mxu0 0.0
        %701 = vmatpush1.msra.mxu0 0.0
        %702 = vmatprep.subr.mxu0 0.0
        %703 = vmatpush1.msra.mxu0 0.0
        %704 = vmatprep.subr.mxu0 0.0
        %705 = vmatpush1.msra.mxu0 0.0
        %706 = vmatprep.subr.mxu0 0.0
        %707 = vmatpush1.msra.mxu0 0.0
        %708 = vmatprep.subr.mxu0 0.0
        %709 = vmatpush1.msra.mxu0 0.0
        %710 = vmatprep.subr.mxu0 0.0
        %711 = vmatpush1.msra.mxu0 0.0
        %712 = vmatprep.subr.mxu0 0.0
        %713 = vmatpush1.msra.mxu0 0.0
        %714 = vmatprep.subr.mxu0 0.0
        %715 = vmatpush1.msra.mxu0 0.0
        %716 = vmatprep.subr.mxu0 0.0
        %717 = vmatpush1.msra.mxu0 0.0
        %718 = vmatprep.subr.mxu0 0.0
        %719 = vmatpush1.msra.mxu0 0.0
        %720 = vmatprep.subr.mxu0 0.0
        %721 = vmatpush1.msra.mxu0 0.0
        %722 = vmatprep.subr.mxu0 0.0
        %723 = vmatpush1.msra.mxu0 0.0
        %724 = vmatprep.subr.mxu0 0.0
        %725 = vmatpush1.msra.mxu0 0.0
        %726 = vmatprep.subr.mxu0 0.0
        %727 = vmatpush1.msra.mxu0 0.0
        %728 = vmatprep.subr.mxu0 0.0
        %729 = vmatpush1.msra.mxu0 0.0
        %730 = vmatprep.subr.mxu0 0.0
        %731 = vmatpush1.msra.mxu0 0.0
        %732 = vmatprep.subr.mxu0 0.0
        %733 = vmatpush1.msra.mxu0 0.0
        %734 = vmatprep.subr.mxu0 0.0
        %735 = vmatpush1.msra.mxu0 0.0
        %736 = vmatprep.mubr.f32.mxu0 0.0
        %737 = vmatmul.mubr.f32.gmra.mrb[0].mxu0 %v667
        %v738 = vpop.f32.mrb[0].mxu0
        %v739 = vadd.f32 0.0, %v738
        %v740 = vpop.f32.mrb[0].mxu0
        %741 = vmatprep.mubr.f32.mxu0 0.0
        %742 = vmatmul.mubr.f32.gmra.mrb[0].mxu0 %v670
        %v743 = vpop.f32.mrb[0].mxu0
        %v744 = vadd.f32 0.0, %v743
        %v745 = vpop.f32.mrb[0].mxu0
        %746 = vdwg.mxu0
        %v747 = vadd.f32 %v490, %v739
        %v748 = vadd.f32 %v495, %v744
        %s749 = scalar_lea.vmem [#allocation8], 128
        %v750 = vld [vmem:[%s749] sm:$0xff]
        %v751 = vld [vmem:[%s749 + $0x8] sm:$0xff]
        %v752 = vld [vmem:[%s749 + $0x10] sm:$0xff]
        %v753 = vld [vmem:[%s749 + $0x18] sm:$0xff]
        %v754 = vld [vmem:[%s749 + $0x20] sm:$0xff]
        %v755 = vld [vmem:[%s749 + $0x28] sm:$0xff]
        %v756 = vld [vmem:[%s749 + $0x30] sm:$0xff]
        %v757 = vld [vmem:[%s749 + $0x38] sm:$0xff]
        %758 = vmatprep.subr.mxu0 0.0
        %759 = vmatpush1.msra.mxu0 %v750
        %760 = vmatprep.subr.mxu0 0.0
        %761 = vmatpush1.msra.mxu0 %v751
        %762 = vmatprep.subr.mxu0 0.0
        %763 = vmatpush1.msra.mxu0 %v752
        %764 = vmatprep.subr.mxu0 0.0
        %765 = vmatpush1.msra.mxu0 %v753
        %766 = vmatprep.subr.mxu0 0.0
        %767 = vmatpush1.msra.mxu0 %v754
        %768 = vmatprep.subr.mxu0 0.0
        %769 = vmatpush1.msra.mxu0 %v755
        %770 = vmatprep.subr.mxu0 0.0
        %771 = vmatpush1.msra.mxu0 %v756
        %772 = vmatprep.subr.mxu0 0.0
        %773 = vmatpush1.msra.mxu0 %v757
        %774 = vmatprep.subr.mxu0 0.0
        %775 = vmatpush1.msra.mxu0 0.0
        %776 = vmatprep.subr.mxu0 0.0
        %777 = vmatpush1.msra.mxu0 0.0
        %778 = vmatprep.subr.mxu0 0.0
        %779 = vmatpush1.msra.mxu0 0.0
        %780 = vmatprep.subr.mxu0 0.0
        %781 = vmatpush1.msra.mxu0 0.0
        %782 = vmatprep.subr.mxu0 0.0
        %783 = vmatpush1.msra.mxu0 0.0
        %784 = vmatprep.subr.mxu0 0.0
        %785 = vmatpush1.msra.mxu0 0.0
        %786 = vmatprep.subr.mxu0 0.0
        %787 = vmatpush1.msra.mxu0 0.0
        %788 = vmatprep.subr.mxu0 0.0
        %789 = vmatpush1.msra.mxu0 0.0
        %790 = vmatprep.subr.mxu0 0.0
        %791 = vmatpush1.msra.mxu0 0.0
        %792 = vmatprep.subr.mxu0 0.0
        %793 = vmatpush1.msra.mxu0 0.0
        %794 = vmatprep.subr.mxu0 0.0
        %795 = vmatpush1.msra.mxu0 0.0
        %796 = vmatprep.subr.mxu0 0.0
        %797 = vmatpush1.msra.mxu0 0.0
        %798 = vmatprep.subr.mxu0 0.0
        %799 = vmatpush1.msra.mxu0 0.0
        %800 = vmatprep.subr.mxu0 0.0
        %801 = vmatpush1.msra.mxu0 0.0
        %802 = vmatprep.subr.mxu0 0.0
        %803 = vmatpush1.msra.mxu0 0.0
        %804 = vmatprep.subr.mxu0 0.0
        %805 = vmatpush1.msra.mxu0 0.0
        %806 = vmatprep.subr.mxu0 0.0
        %807 = vmatpush1.msra.mxu0 0.0
        %808 = vmatprep.subr.mxu0 0.0
        %809 = vmatpush1.msra.mxu0 0.0
        %810 = vmatprep.subr.mxu0 0.0
        %811 = vmatpush1.msra.mxu0 0.0
        %812 = vmatprep.subr.mxu0 0.0
        %813 = vmatpush1.msra.mxu0 0.0
        %814 = vmatprep.subr.mxu0 0.0
        %815 = vmatpush1.msra.mxu0 0.0
        %816 = vmatprep.subr.mxu0 0.0
        %817 = vmatpush1.msra.mxu0 0.0
        %818 = vmatprep.subr.mxu0 0.0
        %819 = vmatpush1.msra.mxu0 0.0
        %820 = vmatprep.subr.mxu0 0.0
        %821 = vmatpush1.msra.mxu0 0.0
        %822 = vmatprep.mubr.f32.mxu0 0.0
        %823 = vmatmul.mubr.f32.gmra.mrb[0].mxu0 %v667
        %v824 = vpop.f32.mrb[0].mxu0
        %v825 = vadd.f32 0.0, %v824
        %v826 = vpop.f32.mrb[0].mxu0
        %827 = vmatprep.mubr.f32.mxu0 0.0
        %828 = vmatmul.mubr.f32.gmra.mrb[0].mxu0 %v670
        %v829 = vpop.f32.mrb[0].mxu0
        %v830 = vadd.f32 0.0, %v829
        %v831 = vpop.f32.mrb[0].mxu0
        %832 = vdwg.mxu0
        %v833 = vadd.f32 %v649, %v825
        %v834 = vadd.f32 %v654, %v830
        %v835 = vld [vmem:[%s4] sm:$0x1]
        %v836 = vlaneseq
        %v837 = vshrl.u32 %v836, 7
        %v838 = vsub.s32 0, %v837
        %v839 = vrot.slane %v835, %v838
        %v840 = vadd.f32 %v747, %v839
        %v841 = vadd.f32 %v748, %v839
        %v842 = vmax.f32 %v840, 0.0
        %v843 = vmax.f32 %v841, 0.0
        %v844 = vrot.slane %v842, 7
        %v845 = vrot.slane %v843, 7
        %v846 = vsel %vm294, %v844, %v845
        %v847 = vsel %vm294, %v845, %v844
        %v848 = vsel %vm297, 0.0, %v847
        %v849 = vsel %vm298, 0.0, %v846
        %v850 = vrot.slane %v842, 1
        %v851 = vrot.slane %v843, 1
        %v852 = vsel %vm303, %v850, %v851
        %v853 = vsel %vm303, %v851, %v850
        %v854 = vsel %vm306, 0.0, %v852
        %v855 = vsel %vm307, 0.0, %v853
        %v856 = vld [vmem:[#allocation7] sm:$0xff]
        %v857 = vld [vmem:[#allocation7 + $0x8] sm:$0xff]
        %v858 = vld [vmem:[#allocation7 + $0x10] sm:$0xff]
        %v859 = vld [vmem:[#allocation7 + $0x18] sm:$0xff]
        %v860 = vld [vmem:[#allocation7 + $0x20] sm:$0xff]
        %v861 = vld [vmem:[#allocation7 + $0x28] sm:$0xff]
        %v862 = vld [vmem:[#allocation7 + $0x30] sm:$0xff]
        %v863 = vld [vmem:[#allocation7 + $0x38] sm:$0xff]
        %v864 = vld [vmem:[#allocation7 + $0x40] sm:$0xff]
        %v865 = vld [vmem:[#allocation7 + $0x48] sm:$0xff]
        %v866 = vld [vmem:[#allocation7 + $0x50] sm:$0xff]
        %v867 = vld [vmem:[#allocation7 + $0x58] sm:$0xff]
        %v868 = vld [vmem:[#allocation7 + $0x60] sm:$0xff]
        %v869 = vld [vmem:[#allocation7 + $0x68] sm:$0xff]
        %v870 = vld [vmem:[#allocation7 + $0x70] sm:$0xff]
        %v871 = vld [vmem:[#allocation7 + $0x78] sm:$0xff]
        %s872 = scalar_lea.vmem [#allocation7], 128
        %v873 = vld [vmem:[%s872] sm:$0xff]
        %v874 = vld [vmem:[%s872 + $0x8] sm:$0xff]
        %v875 = vld [vmem:[%s872 + $0x10] sm:$0xff]
        %v876 = vld [vmem:[%s872 + $0x18] sm:$0xff]
        %v877 = vld [vmem:[%s872 + $0x20] sm:$0xff]
        %v878 = vld [vmem:[%s872 + $0x28] sm:$0xff]
        %v879 = vld [vmem:[%s872 + $0x30] sm:$0xff]
        %v880 = vld [vmem:[%s872 + $0x38] sm:$0xff]
        %v881 = vld [vmem:[%s872 + $0x40] sm:$0xff]
        %v882 = vld [vmem:[%s872 + $0x48] sm:$0xff]
        %v883 = vld [vmem:[%s872 + $0x50] sm:$0xff]
        %v884 = vld [vmem:[%s872 + $0x58] sm:$0xff]
        %v885 = vld [vmem:[%s872 + $0x60] sm:$0xff]
        %v886 = vld [vmem:[%s872 + $0x68] sm:$0xff]
        %v887 = vld [vmem:[%s872 + $0x70] sm:$0xff]
        %v888 = vld [vmem:[%s872 + $0x78] sm:$0xff]
        %889 = vmatprep.subr.mxu0 0.0
        %890 = vmatpush1.msra.mxu0 %v873
        %891 = vmatprep.subr.mxu0 0.0
        %892 = vmatpush1.msra.mxu0 %v874
        %893 = vmatprep.subr.mxu0 0.0
        %894 = vmatpush1.msra.mxu0 %v875
        %895 = vmatprep.subr.mxu0 0.0
        %896 = vmatpush1.msra.mxu0 %v876
        %897 = vmatprep.subr.mxu0 0.0
        %898 = vmatpush1.msra.mxu0 %v877
        %899 = vmatprep.subr.mxu0 0.0
        %900 = vmatpush1.msra.mxu0 %v878
        %901 = vmatprep.subr.mxu0 0.0
        %902 = vmatpush1.msra.mxu0 %v879
        %903 = vmatprep.subr.mxu0 0.0
        %904 = vmatpush1.msra.mxu0 %v880
        %905 = vmatprep.subr.mxu0 0.0
        %906 = vmatpush1.msra.mxu0 %v881
        %907 = vmatprep.subr.mxu0 0.0
        %908 = vmatpush1.msra.mxu0 %v882
        %909 = vmatprep.subr.mxu0 0.0
        %910 = vmatpush1.msra.mxu0 %v883
        %911 = vmatprep.subr.mxu0 0.0
        %912 = vmatpush1.msra.mxu0 %v884
        %913 = vmatprep.subr.mxu0 0.0
        %914 = vmatpush1.msra.mxu0 %v885
        %915 = vmatprep.subr.mxu0 0.0
        %916 = vmatpush1.msra.mxu0 %v886
        %917 = vmatprep.subr.mxu0 0.0
        %918 = vmatpush1.msra.mxu0 %v887
        %919 = vmatprep.subr.mxu0 0.0
        %920 = vmatpush1.msra.mxu0 %v888
        %921 = vmatprep.subr.mxu0 0.0
        %922 = vmatpush1.msra.mxu0 0.0
        %923 = vmatprep.subr.mxu0 0.0
        %924 = vmatpush1.msra.mxu0 0.0
        %925 = vmatprep.subr.mxu0 0.0
        %926 = vmatpush1.msra.mxu0 0.0
        %927 = vmatprep.subr.mxu0 0.0
        %928 = vmatpush1.msra.mxu0 0.0
        %929 = vmatprep.subr.mxu0 0.0
        %930 = vmatpush1.msra.mxu0 0.0
        %931 = vmatprep.subr.mxu0 0.0
        %932 = vmatpush1.msra.mxu0 0.0
        %933 = vmatprep.subr.mxu0 0.0
        %934 = vmatpush1.msra.mxu0 0.0
        %935 = vmatprep.subr.mxu0 0.0
        %936 = vmatpush1.msra.mxu0 0.0
        %937 = vmatprep.subr.mxu0 0.0
        %938 = vmatpush1.msra.mxu0 0.0
        %939 = vmatprep.subr.mxu0 0.0
        %940 = vmatpush1.msra.mxu0 0.0
        %941 = vmatprep.subr.mxu0 0.0
        %942 = vmatpush1.msra.mxu0 0.0
        %943 = vmatprep.subr.mxu0 0.0
        %944 = vmatpush1.msra.mxu0 0.0
        %945 = vmatprep.subr.mxu0 0.0
        %946 = vmatpush1.msra.mxu0 0.0
        %947 = vmatprep.subr.mxu0 0.0
        %948 = vmatpush1.msra.mxu0 0.0
        %949 = vmatprep.subr.mxu0 0.0
        %950 = vmatpush1.msra.mxu0 0.0
        %951 = vmatprep.subr.mxu0 0.0
        %952 = vmatpush1.msra.mxu0 0.0
        %953 = vmatprep.mubr.f32.mxu0 0.0
        %954 = vmatmul.mubr.f32.gmra.mrb[0].mxu0 %v842
        %v955 = vpop.f32.mrb[0].mxu0
        %v956 = vadd.f32 0.0, %v955
        %v957 = vpop.f32.mrb[0].mxu0
        %958 = vmatprep.mubr.f32.mxu0 0.0
        %959 = vmatmul.mubr.f32.gmra.mrb[0].mxu0 %v843
        %v960 = vpop.f32.mrb[0].mxu0
        %v961 = vadd.f32 0.0, %v960
        %v962 = vpop.f32.mrb[0].mxu0
        %963 = vdwg.mxu0
        %964 = vmatprep.subr.mxu0 0.0
        %965 = vmatpush1.msra.mxu0 %v856
        %966 = vmatprep.subr.mxu0 0.0
        %967 = vmatpush1.msra.mxu0 %v857
        %968 = vmatprep.subr.mxu0 0.0
        %969 = vmatpush1.msra.mxu0 %v858
        %970 = vmatprep.subr.mxu0 0.0
        %971 = vmatpush1.msra.mxu0 %v859
        %972 = vmatprep.subr.mxu0 0.0
        %973 = vmatpush1.msra.mxu0 %v860
        %974 = vmatprep.subr.mxu0 0.0
        %975 = vmatpush1.msra.mxu0 %v861
        %976 = vmatprep.subr.mxu0 0.0
        %977 = vmatpush1.msra.mxu0 %v862
        %978 = vmatprep.subr.mxu0 0.0
        %979 = vmatpush1.msra.mxu0 %v863
        %980 = vmatprep.subr.mxu0 0.0
        %981 = vmatpush1.msra.mxu0 %v864
        %982 = vmatprep.subr.mxu0 0.0
        %983 = vmatpush1.msra.mxu0 %v865
        %984 = vmatprep.subr.mxu0 0.0
        %985 = vmatpush1.msra.mxu0 %v866
        %986 = vmatprep.subr.mxu0 0.0
        %987 = vmatpush1.msra.mxu0 %v867
        %988 = vmatprep.subr.mxu0 0.0
        %989 = vmatpush1.msra.mxu0 %v868
        %990 = vmatprep.subr.mxu0 0.0
        %991 = vmatpush1.msra.mxu0 %v869
        %992 = vmatprep.subr.mxu0 0.0
        %993 = vmatpush1.msra.mxu0 %v870
        %994 = vmatprep.subr.mxu0 0.0
        %995 = vmatpush1.msra.mxu0 %v871
        %996 = vmatprep.subr.mxu0 0.0
        %997 = vmatpush1.msra.mxu0 0.0
        %998 = vmatprep.subr.mxu0 0.0
        %999 = vmatpush1.msra.mxu0 0.0
        %1000 = vmatprep.subr.mxu0 0.0
        %1001 = vmatpush1.msra.mxu0 0.0
        %1002 = vmatprep.subr.mxu0 0.0
        %1003 = vmatpush1.msra.mxu0 0.0
        %1004 = vmatprep.subr.mxu0 0.0
        %1005 = vmatpush1.msra.mxu0 0.0
        %1006 = vmatprep.subr.mxu0 0.0
        %1007 = vmatpush1.msra.mxu0 0.0
        %1008 = vmatprep.subr.mxu0 0.0
        %1009 = vmatpush1.msra.mxu0 0.0
        %1010 = vmatprep.subr.mxu0 0.0
        %1011 = vmatpush1.msra.mxu0 0.0
        %1012 = vmatprep.subr.mxu0 0.0
        %1013 = vmatpush1.msra.mxu0 0.0
        %1014 = vmatprep.subr.mxu0 0.0
        %1015 = vmatpush1.msra.mxu0 0.0
        %1016 = vmatprep.subr.mxu0 0.0
        %1017 = vmatpush1.msra.mxu0 0.0
        %1018 = vmatprep.subr.mxu0 0.0
        %1019 = vmatpush1.msra.mxu0 0.0
        %1020 = vmatprep.subr.mxu0 0.0
        %1021 = vmatpush1.msra.mxu0 0.0
        %1022 = vmatprep.subr.mxu0 0.0
        %1023 = vmatpush1.msra.mxu0 0.0
        %1024 = vmatprep.subr.mxu0 0.0
        %1025 = vmatpush1.msra.mxu0 0.0
        %1026 = vmatprep.subr.mxu0 0.0
        %1027 = vmatpush1.msra.mxu0 0.0
        %1028 = vmatprep.mubr.f32.mxu0 0.0
        %1029 = vmatmul.mubr.f32.gmra.mrb[0].mxu0 %v848
        %v1030 = vpop.f32.mrb[0].mxu0
        %v1031 = vadd.f32 %v956, %v1030
        %v1032 = vpop.f32.mrb[0].mxu0
        %1033 = vmatprep.mubr.f32.mxu0 0.0
        %1034 = vmatmul.mubr.f32.gmra.mrb[0].mxu0 %v849
        %v1035 = vpop.f32.mrb[0].mxu0
        %v1036 = vadd.f32 %v961, %v1035
        %v1037 = vpop.f32.mrb[0].mxu0
        %1038 = vdwg.mxu0
        %s1039 = scalar_lea.vmem [#allocation7], 256
        %v1040 = vld [vmem:[%s1039] sm:$0xff]
        %v1041 = vld [vmem:[%s1039 + $0x8] sm:$0xff]
        %v1042 = vld [vmem:[%s1039 + $0x10] sm:$0xff]
        %v1043 = vld [vmem:[%s1039 + $0x18] sm:$0xff]
        %v1044 = vld [vmem:[%s1039 + $0x20] sm:$0xff]
        %v1045 = vld [vmem:[%s1039 + $0x28] sm:$0xff]
        %v1046 = vld [vmem:[%s1039 + $0x30] sm:$0xff]
        %v1047 = vld [vmem:[%s1039 + $0x38] sm:$0xff]
        %v1048 = vld [vmem:[%s1039 + $0x40] sm:$0xff]
        %v1049 = vld [vmem:[%s1039 + $0x48] sm:$0xff]
        %v1050 = vld [vmem:[%s1039 + $0x50] sm:$0xff]
        %v1051 = vld [vmem:[%s1039 + $0x58] sm:$0xff]
        %v1052 = vld [vmem:[%s1039 + $0x60] sm:$0xff]
        %v1053 = vld [vmem:[%s1039 + $0x68] sm:$0xff]
        %v1054 = vld [vmem:[%s1039 + $0x70] sm:$0xff]
        %v1055 = vld [vmem:[%s1039 + $0x78] sm:$0xff]
        %1056 = vmatprep.subr.mxu0 0.0
        %1057 = vmatpush1.msra.mxu0 %v1040
        %1058 = vmatprep.subr.mxu0 0.0
        %1059 = vmatpush1.msra.mxu0 %v1041
        %1060 = vmatprep.subr.mxu0 0.0
        %1061 = vmatpush1.msra.mxu0 %v1042
        %1062 = vmatprep.subr.mxu0 0.0
        %1063 = vmatpush1.msra.mxu0 %v1043
        %1064 = vmatprep.subr.mxu0 0.0
        %1065 = vmatpush1.msra.mxu0 %v1044
        %1066 = vmatprep.subr.mxu0 0.0
        %1067 = vmatpush1.msra.mxu0 %v1045
        %1068 = vmatprep.subr.mxu0 0.0
        %1069 = vmatpush1.msra.mxu0 %v1046
        %1070 = vmatprep.subr.mxu0 0.0
        %1071 = vmatpush1.msra.mxu0 %v1047
        %1072 = vmatprep.subr.mxu0 0.0
        %1073 = vmatpush1.msra.mxu0 %v1048
        %1074 = vmatprep.subr.mxu0 0.0
        %1075 = vmatpush1.msra.mxu0 %v1049
        %1076 = vmatprep.subr.mxu0 0.0
        %1077 = vmatpush1.msra.mxu0 %v1050
        %1078 = vmatprep.subr.mxu0 0.0
        %1079 = vmatpush1.msra.mxu0 %v1051
        %1080 = vmatprep.subr.mxu0 0.0
        %1081 = vmatpush1.msra.mxu0 %v1052
        %1082 = vmatprep.subr.mxu0 0.0
        %1083 = vmatpush1.msra.mxu0 %v1053
        %1084 = vmatprep.subr.mxu0 0.0
        %1085 = vmatpush1.msra.mxu0 %v1054
        %1086 = vmatprep.subr.mxu0 0.0
        %1087 = vmatpush1.msra.mxu0 %v1055
        %1088 = vmatprep.subr.mxu0 0.0
        %1089 = vmatpush1.msra.mxu0 0.0
        %1090 = vmatprep.subr.mxu0 0.0
        %1091 = vmatpush1.msra.mxu0 0.0
        %1092 = vmatprep.subr.mxu0 0.0
        %1093 = vmatpush1.msra.mxu0 0.0
        %1094 = vmatprep.subr.mxu0 0.0
        %1095 = vmatpush1.msra.mxu0 0.0
        %1096 = vmatprep.subr.mxu0 0.0
        %1097 = vmatpush1.msra.mxu0 0.0
        %1098 = vmatprep.subr.mxu0 0.0
        %1099 = vmatpush1.msra.mxu0 0.0
        %1100 = vmatprep.subr.mxu0 0.0
        %1101 = vmatpush1.msra.mxu0 0.0
        %1102 = vmatprep.subr.mxu0 0.0
        %1103 = vmatpush1.msra.mxu0 0.0
        %1104 = vmatprep.subr.mxu0 0.0
        %1105 = vmatpush1.msra.mxu0 0.0
        %1106 = vmatprep.subr.mxu0 0.0
        %1107 = vmatpush1.msra.mxu0 0.0
        %1108 = vmatprep.subr.mxu0 0.0
        %1109 = vmatpush1.msra.mxu0 0.0
        %1110 = vmatprep.subr.mxu0 0.0
        %1111 = vmatpush1.msra.mxu0 0.0
        %1112 = vmatprep.subr.mxu0 0.0
        %1113 = vmatpush1.msra.mxu0 0.0
        %1114 = vmatprep.subr.mxu0 0.0
        %1115 = vmatpush1.msra.mxu0 0.0
        %1116 = vmatprep.subr.mxu0 0.0
        %1117 = vmatpush1.msra.mxu0 0.0
        %1118 = vmatprep.subr.mxu0 0.0
        %1119 = vmatpush1.msra.mxu0 0.0
        %1120 = vmatprep.mubr.f32.mxu0 0.0
        %1121 = vmatmul.mubr.f32.gmra.mrb[0].mxu0 %v854
        %v1122 = vpop.f32.mrb[0].mxu0
        %v1123 = vadd.f32 0.0, %v1122
        %v1124 = vpop.f32.mrb[0].mxu0
        %1125 = vmatprep.mubr.f32.mxu0 0.0
        %1126 = vmatmul.mubr.f32.gmra.mrb[0].mxu0 %v855
        %v1127 = vpop.f32.mrb[0].mxu0
        %v1128 = vadd.f32 0.0, %v1127
        %v1129 = vpop.f32.mrb[0].mxu0
        %1130 = vdwg.mxu0
        %v1131 = vadd.f32 %v1031, %v1123
        %v1132 = vadd.f32 %v1036, %v1128
        %v1133 = vadd.f32 %v1131, %v833
        %v1134 = vadd.f32 %v1132, %v834
        %v1135 = vld [vmem:[%s4 + $0x1] sm:$0x1]
        %v1136 = vlaneseq
        %v1137 = vshrl.u32 %v1136, 7
        %v1138 = vsub.s32 0, %v1137
        %v1139 = vrot.slane %v1135, %v1138
        %v1140 = vadd.f32 %v1133, %v1139
        %v1141 = vadd.f32 %v1134, %v1139
        %v1142 = vlaneseq
        %v1143 = vand.u32 %v1142, 127
        %vm1144 = vcmp.lt.s32.totalorder %v1143, 8
        %1145 = vrot.lane.b32.xlu0 %v1140, 8
        %v1146 = vpop.permute.xlu0 %1145
        %1147 = vrot.lane.b32.xlu0 %v1141, 8
        %v1148 = vpop.permute.xlu0 %1147
        %v1149 = vsel %vm1144, -inf, %v1146
        %v1150 = vsel %vm1144, -inf, %v1148
        %vm1151 = vcmp.ge.s32.totalorder %v1143, 120
        %1152 = vrot.lane.b32.xlu0 %v1140, 120
        %v1153 = vpop.permute.xlu0 %1152
        %1154 = vrot.lane.b32.xlu0 %v1141, 120
        %v1155 = vpop.permute.xlu0 %1154
        %v1156 = vsel %vm1151, -inf, %v1153
        %v1157 = vsel %vm1151, -inf, %v1155
        %v1158 = vmax.f32 %v1149, %v1156
        %v1159 = vmax.f32 %v1150, %v1157
        %v1160 = vmax.f32 %v1140, %v1158
        %v1161 = vmax.f32 %v1141, %v1159
        %v1162 = vrot.slane %v1160, 7
        %v1163 = vrot.slane %v1161, 7
        %v1164 = vsel %vm294, %v1162, %v1163
        %v1165 = vsel %vm294, %v1163, %v1162
        %v1166 = vsel %vm297, -inf, %v1165
        %v1167 = vsel %vm298, -inf, %v1164
        %v1168 = vrot.slane %v1160, 1
        %v1169 = vrot.slane %v1161, 1
        %v1170 = vsel %vm303, %v1168, %v1169
        %v1171 = vsel %vm303, %v1169, %v1168
        %v1172 = vsel %vm306, -inf, %v1170
        %v1173 = vsel %vm307, -inf, %v1171
        %v1174 = vmax.f32 %v1166, %v1172
        %v1175 = vmax.f32 %v1167, %v1173
        %v1176 = vmax.f32 %v1160, %v1174
        %v1177 = vmax.f32 %v1161, %v1175
        %1178 = vst [vmem:[%s286] sm:$0xff] %v1176
        %1179 = vst [vmem:[%s286 + $0x8] sm:$0xff] %v1177
        %s1180 = sand.u32 %s142, 1
        %s1181 = scalar_lea.sflag [#allocation4], %s1180
        %s1182 = sand.u32 %s142, 1
        %s1183 = smul.addr %s1182, 16
        %s1184 = scalar_lea.vmem [#allocation10], %s1183
        // Predicated region
        $region57: #{tpu_custom_call.1} parent=39 // pred_check
          %p1185 = pneg %p152
        $region58: #{tpu_custom_call.1} parent=39 // pred_check_branch
          %1187 = sbr.rel (%p1185) target = $region60
        $region59: #{tpu_custom_call.1} parent=39 // pred_region
          %s1189 = ssub.s32 256, 256
          %1190 = vsyncadd %s1181, %s1189
          %s1191 = smul.addr %s24, 2
          %s1192 = smul.addr %s1191, 128
          %s1193 = scalar_lea.hbm %s5, %s1192
          %s1194 = sshll.u32 %s1184, 4
          %s1195 = int_to_ptr.vmem [resolvable:$true] %s1194
          %1200 = dma.vmem_to_hbm [thread:$0]  %s1195, 256, %s1193, %s1181, 128, 128, 8
        $region60: #{tpu_custom_call.1} parent=39 // pred_fallthru
          _
      $region40: #{tpu_custom_call.1} parent=5 // pred_fallthru
        _
      %p1201 = scmp.le.s32.totalorder 2, %s19
      // Predicated region
      $region61: #{tpu_custom_call.1} parent=5 // pred_check
        %p1202 = pneg %p1201
      $region62: #{tpu_custom_call.1} parent=5 // pred_check_branch
        %1204 = sbr.rel (%p1202) target = $region64
      $region63: #{tpu_custom_call.1} parent=5 // pred_region
        %s1205 = ssub.s32 %s19, 2
        // Predicated region
        $region65: #{tpu_custom_call.1} parent=63 // pred_check
          %p1206 = pneg %p158
        $region66: #{tpu_custom_call.1} parent=63 // pred_check_branch
          %1208 = sbr.rel (%p1206) target = $region68
        $region67: #{tpu_custom_call.1} parent=63 // pred_region
          %s1209 = sand.u32 %s143, 1
          %s1210 = scalar_lea.sflag [#allocation4], %s1209
          %s1211 = sand.u32 %s143, 1
          %s1212 = smul.addr %s1211, 16
          %s1213 = scalar_lea.vmem [#allocation10], %s1212
          %1214 = dma.done %s1210, 256
        $region68: #{tpu_custom_call.1} parent=63 // pred_fallthru
          _
      $region64: #{tpu_custom_call.1} parent=5 // pred_fallthru
        _
    $region6: #{tpu_custom_call.1} parent=1 // loop_footer
      %s23 = sadd.s32 1, %s19
    $region7: #{tpu_custom_call.1} parent=1 // loop_footer_branch
      %18 = sbr.rel target = $region3
    $region8: #{tpu_custom_call.1} parent=1 // loop_exit
      _
    %1215 = vsyncpa [#allocation3], 1
    %s1216 = scalar_lea.sflag [#allocation3], 1
    %1217 = vsyncpa %s1216, 1
    %1218 = vsyncpa [#allocation6], 1
    %1219 = vsyncpa [#allocation9], 1
    %1220 = vsyncpa [#allocation4], 1
    %s1221 = scalar_lea.sflag [#allocation4], 1
    %1222 = vsyncpa %s1221, 1

</llo_original>
